<compile_context>
chip_gen: v5e
topology: v5e:2x2
jax: 0.10.0
libtpu: 0.0.40
codegen_flags: <defaults>
</compile_context>

<pallas_src>
import jax
import jax.numpy as jnp
import numpy as np
from jax import lax
from jax.experimental import pallas as pl
from jax.experimental.pallas import tpu as pltpu

# ---- small, module-consistent sizes -------------------------------------------------
BSZ = 2
NUM_ENT = 7          # entities per scene
NUM_FRAMES = 8       # frames (GRU sequence length)
DIM_ENT = 4          # domain.dim_ent()  (x, y, size, color)
NUM_BIN = 3          # domain.num_bin()
NEMBED = 32          # args.nembed_ctx (even)
H2 = NEMBED // 2
INIT_RANGE = 0.1     # args.init_range


# ---- Pallas kernel: whole batch in one invocation -----------------------------------
def attention_ctx_kernel(pair_i_ref, pair_j_ref, bidx_ref,
                         wp_ref, bp_ref,
                         wr_blk_ref, dist_exp_ref, br_tile_ref, br_ref,
                         xy_sel_ref, sum_j_ref, tab_ref,
                         wih_ref, bih_ref, whh_ref, bhh_ref,
                         o_ref):
    R = pair_i_ref.shape[0]            # F * B * E rows (frame-major)
    N, NE = o_ref.shape                # N = B*E GRU rows, NE = nembed_ctx
    F = R // N
    D = wp_ref.shape[0]
    NB = bidx_ref.shape[1]
    TWONB = tab_ref.shape[0]

    pair_i = pair_i_ref[...]           # (R, E*D): lanes j*D+d = e_i[d] (replicated over j)
    pair_j = pair_j_ref[...]           # (R, E*D): lanes j*D+d = e_j[d]

    # -- property encoder: tanh(e_i @ Wp + bp) -----------------------------------
    prop = jnp.tanh(
        jnp.dot(pair_i[:, :D], wp_ref[...], preferred_element_type=jnp.float32)
        + bp_ref[...])                                            # (R, H2)

    # -- relation encoder, pairs packed along lanes -------------------------------
    diff = pair_i - pair_j                                        # (R, E*D)
    # squared x/y distance per partner j (block-diag selector picks d in {0,1})
    d2 = jnp.dot(diff * diff, xy_sel_ref[...],
                 preferred_element_type=jnp.float32)              # (R, E)
    dist = jnp.sqrt(d2)                                           # (R, E)
    rel = jnp.tanh(
        jnp.dot(diff, wr_blk_ref[...], preferred_element_type=jnp.float32)
        + jnp.dot(dist, dist_exp_ref[...], preferred_element_type=jnp.float32)
        + br_tile_ref[...])                                       # (R, E*H2)
    # Sum over partners j. The j==i block is exactly tanh(br) since diff=dist=0
    # there, so subtracting it reproduces the module's "skip i==j" loop.
    rel_sum = (jnp.dot(rel, sum_j_ref[...], preferred_element_type=jnp.float32)
               - jnp.tanh(br_ref[...]))                           # (R, H2)

    # -- binary feature embeddings: one-hot counts @ table ------------------------
    bidx = bidx_ref[...]                                          # (R, NB) int32
    kio = lax.broadcasted_iota(jnp.int32, (R, TWONB), 1)
    counts = jnp.zeros((R, TWONB), jnp.float32)
    for b in range(NB):                                           # NB = 3, static
        counts = counts + (bidx[:, b:b + 1] == kio).astype(jnp.float32)
    bin_emb = jnp.dot(counts, tab_ref[...],
                      preferred_element_type=jnp.float32)         # (R, NE)

    # -- GRU input; input-side gates hoisted out of the recurrence ----------------
    x = jnp.concatenate([prop, rel_sum], axis=1) + bin_emb        # (R, NE)
    gx = jnp.dot(x, wih_ref[...],
                 preferred_element_type=jnp.float32) + bih_ref[...]   # (R, 3*NE)

    # -- GRU over frames, fully unrolled (PyTorch gate order r, z, n) -------------
    whh = whh_ref[...]
    bhh = bhh_ref[...]
    h = jnp.zeros((N, NE), jnp.float32)
    for t in range(F):                              # static unroll (F = 8)
        gx_t = gx[t * N:(t + 1) * N, :]             # precomputed, off the serial chain
        gh = jnp.dot(h, whh, preferred_element_type=jnp.float32) + bhh
        r = jax.nn.sigmoid(gx_t[:, 0:NE] + gh[:, 0:NE])
        z = jax.nn.sigmoid(gx_t[:, NE:2 * NE] + gh[:, NE:2 * NE])
        n = jnp.tanh(gx_t[:, 2 * NE:3 * NE] + r * gh[:, 2 * NE:3 * NE])
        h = (1.0 - z) * n + z * h
    o_ref[...] = h                                  # (N, NE)


# ---- wrapper (PyTorch-layout interface) ----------------------------------------------
def attention_context_encoder(entities, binary_features, params):
    """entities: (bsz, num_ent, num_frames, dim_ent); binary_features: (bsz, num_ent, num_frames, num_bin)."""
    wp, bp, wr, br, tab, wih, bih, whh, bhh = params
    bsz, E, F, D = entities.shape
    NB = binary_features.shape[-1]
    HH = wp.shape[1]
    NE = wih.shape[0]
    N = bsz * E
    R = F * N

    # Frame-major, pair-broadcast layouts (pure layout plumbing, no arithmetic):
    #   row r = ((f*bsz + b)*E + i);  lanes j*D+d.
    e_t = jnp.transpose(entities, (2, 0, 1, 3)).astype(jnp.float32)       # (F, B, E, D)
    pair_i = jnp.broadcast_to(e_t[:, :, :, None, :], (F, bsz, E, E, D)).reshape(R, E * D)
    pair_j = jnp.broadcast_to(e_t[:, :, None, :, :], (F, bsz, E, E, D)).reshape(R, E * D)
    b_flat = jnp.transpose(binary_features, (2, 0, 1, 3)).astype(jnp.int32).reshape(R, NB)

    # Block-structured weight / selector matrices (layout-only transforms of wr, br).
    eyeE = jnp.eye(E, dtype=jnp.float32)
    wr_blk = jnp.kron(eyeE, wr[:D, :])                    # (E*D, E*HH): per-pair diff linear
    dist_exp = jnp.kron(eyeE, wr[D:D + 1, :])             # (E,   E*HH): per-pair dist column
    br_tile = jnp.tile(br, (1, E))                        # (1,   E*HH)
    xy = np.zeros((D, 1), np.float32)
    xy[0, 0] = 1.0
    xy[1, 0] = 1.0
    xy_sel = jnp.asarray(np.kron(np.eye(E, dtype=np.float32), xy))        # (E*D, E)
    sum_j = jnp.asarray(np.kron(np.ones((E, 1), np.float32),
                                np.eye(HH, dtype=np.float32)))            # (E*HH, HH)

    vmem = pl.BlockSpec(memory_space=pltpu.MemorySpace.VMEM)
    out = pl.pallas_call(
        attention_ctx_kernel,
        out_shape=jax.ShapeDtypeStruct((N, NE), jnp.float32),
        in_specs=[vmem] * 16,
        out_specs=vmem,
    )(pair_i, pair_j, b_flat,
      wp, bp, wr_blk, dist_exp, br_tile, br, xy_sel, sum_j, tab,
      wih, bih, whh, bhh)
    return out.reshape(bsz, E, NE)


# ---- deterministic parameter init (mirrors the module's uniform init) -----------------
def init_params(key):
    ks = jax.random.split(key, 9)
    u = lambda k, shape: jax.random.uniform(k, shape, jnp.float32, -INIT_RANGE, INIT_RANGE)
    wp = u(ks[0], (DIM_ENT, H2))             # property_encoder Linear
    bp = u(ks[1], (1, H2))
    wr = u(ks[2], (DIM_ENT + 1, H2))         # relation_encoder Linear
    br = u(ks[3], (1, H2))
    tab = u(ks[4], (2 * NUM_BIN, NEMBED))    # binary_encoder Embedding
    wih = u(ks[5], (NEMBED, 3 * NEMBED))     # GRU W_ih (cols = [r | z | n]; transpose of torch layout)
    bih = u(ks[6], (1, 3 * NEMBED))
    whh = u(ks[7], (NEMBED, 3 * NEMBED))     # GRU W_hh
    bhh = u(ks[8], (1, 3 * NEMBED))
    return (wp, bp, wr, br, tab, wih, bih, whh, bhh)


# ---- pure-JAX reference (same semantics as the PyTorch forward, eval mode) ------------
def reference(entities, binary_features, params):
    wp, bp, wr, br, tab, wih, bih, whh, bhh = params
    bsz, E, F, D = entities.shape
    prop = jnp.tanh(entities @ wp + bp)                         # (bsz, E, F, H2)
    diff = entities[:, :, None] - entities[:, None, :]          # (bsz, Ei, Ej, F, D)
    dist = jnp.sqrt(diff[..., 0] ** 2 + diff[..., 1] ** 2)      # (bsz, Ei, Ej, F)
    feat = jnp.concatenate([diff, dist[..., None]], axis=-1)    # (bsz, Ei, Ej, F, D+1)
    rel = jnp.tanh(feat @ wr + br)                              # (bsz, Ei, Ej, F, H2)
    mask = ~jnp.eye(E, dtype=bool)
    rel = jnp.where(mask[None, :, :, None, None], rel, 0.0)
    rel_sum = jnp.sum(rel, axis=2)                              # (bsz, Ei, F, H2)
    ent_emb = jnp.concatenate([prop, rel_sum], axis=-1)         # (bsz, E, F, NEMBED)
    bin_emb = jnp.sum(tab[binary_features], axis=3)             # (bsz, E, F, NEMBED)
    x = (ent_emb + bin_emb).reshape(bsz * E, F, NEMBED)
    h = jnp.zeros((bsz * E, NEMBED), jnp.float32)
    for t in range(F):
        xt = x[:, t]
        gx = xt @ wih + bih
        gh = h @ whh + bhh
        r = jax.nn.sigmoid(gx[:, :NEMBED] + gh[:, :NEMBED])
        z = jax.nn.sigmoid(gx[:, NEMBED:2 * NEMBED] + gh[:, NEMBED:2 * NEMBED])
        n = jnp.tanh(gx[:, 2 * NEMBED:] + r * gh[:, 2 * NEMBED:])
        h = (1.0 - z) * n + z * h
    return h.reshape(bsz, E, NEMBED)


if __name__ == "__main__":
    key = jax.random.PRNGKey(0)
    k_e, k_b, k_p = jax.random.split(key, 3)

    entities = jax.random.uniform(
        k_e, (BSZ, NUM_ENT, NUM_FRAMES, DIM_ENT), jnp.float32, -1.0, 1.0)
    # binary feature b selects embedding row 2*b or 2*b + 1
    bern = jax.random.bernoulli(
        k_b, 0.5, (BSZ, NUM_ENT, NUM_FRAMES, NUM_BIN)).astype(jnp.int32)
    binary_features = 2 * jnp.arange(NUM_BIN, dtype=jnp.int32) + bern

    params = init_params(k_p)

    fn = jax.jit(lambda e, b: attention_context_encoder(e, b, params))
    out = jax.block_until_ready(fn(entities, binary_features))

    ref = reference(entities, binary_features, params)
    np.testing.assert_allclose(np.asarray(out), np.asarray(ref), rtol=1e-4, atol=1e-4)
    print("KERNEL_OK")
</pallas_src>

<mosaic_0001>
module attributes {stable_mosaic.version = 11 : i64} {
  func.func @attention_ctx_kernel(%arg0: memref<112x28xf32, #tpu.memory_space<vmem>>, %arg1: memref<112x28xf32, #tpu.memory_space<vmem>>, %arg2: memref<112x3xi32, #tpu.memory_space<vmem>>, %arg3: memref<4x16xf32, #tpu.memory_space<vmem>>, %arg4: memref<1x16xf32, #tpu.memory_space<vmem>>, %arg5: memref<28x112xf32, #tpu.memory_space<vmem>>, %arg6: memref<7x112xf32, #tpu.memory_space<vmem>>, %arg7: memref<1x112xf32, #tpu.memory_space<vmem>>, %arg8: memref<1x16xf32, #tpu.memory_space<vmem>>, %arg9: memref<28x7xf32, #tpu.memory_space<vmem>>, %arg10: memref<112x16xf32, #tpu.memory_space<vmem>>, %arg11: memref<6x32xf32, #tpu.memory_space<vmem>>, %arg12: memref<32x96xf32, #tpu.memory_space<vmem>>, %arg13: memref<1x96xf32, #tpu.memory_space<vmem>>, %arg14: memref<32x96xf32, #tpu.memory_space<vmem>>, %arg15: memref<1x96xf32, #tpu.memory_space<vmem>>, %arg16: memref<14x32xf32, #tpu.memory_space<vmem>>) attributes {dimension_semantics = [], scalar_prefetch = 0 : i64, scratch_operands = 0 : i64, tpu.core_type = #tpu.core_type<tc>} {
    %c0 = arith.constant 0 : index
    %c0_0 = arith.constant 0 : index
    %0 = vector.load %arg0[%c0, %c0_0] : memref<112x28xf32, #tpu.memory_space<vmem>>, vector<112x28xf32>
    %c0_1 = arith.constant 0 : index
    %c0_2 = arith.constant 0 : index
    %1 = vector.load %arg1[%c0_1, %c0_2] : memref<112x28xf32, #tpu.memory_space<vmem>>, vector<112x28xf32>
    %2 = vector.extract_strided_slice %0 {offsets = [0, 0], sizes = [112, 4], strides = [1, 1]} : vector<112x28xf32> to vector<112x4xf32>
    %c0_3 = arith.constant 0 : index
    %c0_4 = arith.constant 0 : index
    %3 = vector.load %arg3[%c0_3, %c0_4] : memref<4x16xf32, #tpu.memory_space<vmem>>, vector<4x16xf32>
    %cst = arith.constant dense<0.000000e+00> : vector<112x16xf32>
    %4 = tpu.matmul %2, %3, %cst {dimension_numbers = #tpu.dot_dimension_numbers<[1], [0], [0], [1], [0, 0, 1, 1], [], []>} : vector<112x4xf32>, vector<4x16xf32>, vector<112x16xf32> -> vector<112x16xf32>
    %c0_5 = arith.constant 0 : index
    %c0_6 = arith.constant 0 : index
    %5 = vector.load %arg4[%c0_5, %c0_6] : memref<1x16xf32, #tpu.memory_space<vmem>>, vector<1x16xf32>
    %6 = vector.broadcast %5 : vector<1x16xf32> to vector<112x16xf32>
    %7 = arith.addf %4, %6 : vector<112x16xf32>
    %8 = math.tanh %7 : vector<112x16xf32>
    %9 = arith.subf %0, %1 : vector<112x28xf32>
    %10 = arith.mulf %9, %9 : vector<112x28xf32>
    %c0_7 = arith.constant 0 : index
    %c0_8 = arith.constant 0 : index
    %11 = vector.load %arg9[%c0_7, %c0_8] : memref<28x7xf32, #tpu.memory_space<vmem>>, vector<28x7xf32>
    %cst_9 = arith.constant dense<0.000000e+00> : vector<112x7xf32>
    %12 = tpu.matmul %10, %11, %cst_9 {dimension_numbers = #tpu.dot_dimension_numbers<[1], [0], [0], [1], [0, 0, 1, 1], [], []>} : vector<112x28xf32>, vector<28x7xf32>, vector<112x7xf32> -> vector<112x7xf32>
    %13 = math.sqrt %12 : vector<112x7xf32>
    %c0_10 = arith.constant 0 : index
    %c0_11 = arith.constant 0 : index
    %14 = vector.load %arg5[%c0_10, %c0_11] : memref<28x112xf32, #tpu.memory_space<vmem>>, vector<28x112xf32>
    %cst_12 = arith.constant dense<0.000000e+00> : vector<112x112xf32>
    %15 = tpu.matmul %9, %14, %cst_12 {dimension_numbers = #tpu.dot_dimension_numbers<[1], [0], [0], [1], [0, 0, 1, 1], [], []>} : vector<112x28xf32>, vector<28x112xf32>, vector<112x112xf32> -> vector<112x112xf32>
    %c0_13 = arith.constant 0 : index
    %c0_14 = arith.constant 0 : index
    %16 = vector.load %arg6[%c0_13, %c0_14] : memref<7x112xf32, #tpu.memory_space<vmem>>, vector<7x112xf32>
    %cst_15 = arith.constant dense<0.000000e+00> : vector<112x112xf32>
    %17 = tpu.matmul %13, %16, %cst_15 {dimension_numbers = #tpu.dot_dimension_numbers<[1], [0], [0], [1], [0, 0, 1, 1], [], []>} : vector<112x7xf32>, vector<7x112xf32>, vector<112x112xf32> -> vector<112x112xf32>
    %18 = arith.addf %15, %17 : vector<112x112xf32>
    %c0_16 = arith.constant 0 : index
    %c0_17 = arith.constant 0 : index
    %19 = vector.load %arg7[%c0_16, %c0_17] : memref<1x112xf32, #tpu.memory_space<vmem>>, vector<1x112xf32>
    %20 = vector.broadcast %19 : vector<1x112xf32> to vector<112x112xf32>
    %21 = arith.addf %18, %20 : vector<112x112xf32>
    %22 = math.tanh %21 : vector<112x112xf32>
    %c0_18 = arith.constant 0 : index
    %c0_19 = arith.constant 0 : index
    %23 = vector.load %arg10[%c0_18, %c0_19] : memref<112x16xf32, #tpu.memory_space<vmem>>, vector<112x16xf32>
    %cst_20 = arith.constant dense<0.000000e+00> : vector<112x16xf32>
    %24 = tpu.matmul %22, %23, %cst_20 {dimension_numbers = #tpu.dot_dimension_numbers<[1], [0], [0], [1], [0, 0, 1, 1], [], []>} : vector<112x112xf32>, vector<112x16xf32>, vector<112x16xf32> -> vector<112x16xf32>
    %c0_21 = arith.constant 0 : index
    %c0_22 = arith.constant 0 : index
    %25 = vector.load %arg8[%c0_21, %c0_22] : memref<1x16xf32, #tpu.memory_space<vmem>>, vector<1x16xf32>
    %26 = math.tanh %25 : vector<1x16xf32>
    %27 = vector.broadcast %26 : vector<1x16xf32> to vector<112x16xf32>
    %28 = arith.subf %24, %27 : vector<112x16xf32>
    %c0_23 = arith.constant 0 : index
    %c0_24 = arith.constant 0 : index
    %29 = vector.load %arg2[%c0_23, %c0_24] : memref<112x3xi32, #tpu.memory_space<vmem>>, vector<112x3xi32>
    %30 = tpu.iota {dimensions = array<i32: 1>} : vector<112x6xi32>
    %cst_25 = arith.constant 0.000000e+00 : f32
    %31 = vector.broadcast %cst_25 : f32 to vector<112x6xf32>
    %32 = vector.extract_strided_slice %29 {offsets = [0, 0], sizes = [112, 1], strides = [1, 1]} : vector<112x3xi32> to vector<112x1xi32>
    %33 = vector.broadcast %32 : vector<112x1xi32> to vector<112x6xi32>
    %34 = arith.cmpi eq, %33, %30 : vector<112x6xi32>
    %35 = arith.extui %34 : vector<112x6xi1> to vector<112x6xi32>
    %36 = arith.sitofp %35 : vector<112x6xi32> to vector<112x6xf32>
    %37 = arith.addf %31, %36 : vector<112x6xf32>
    %38 = vector.extract_strided_slice %29 {offsets = [0, 1], sizes = [112, 1], strides = [1, 1]} : vector<112x3xi32> to vector<112x1xi32>
    %39 = vector.broadcast %38 : vector<112x1xi32> to vector<112x6xi32>
    %40 = arith.cmpi eq, %39, %30 : vector<112x6xi32>
    %41 = arith.extui %40 : vector<112x6xi1> to vector<112x6xi32>
    %42 = arith.sitofp %41 : vector<112x6xi32> to vector<112x6xf32>
    %43 = arith.addf %37, %42 : vector<112x6xf32>
    %44 = vector.extract_strided_slice %29 {offsets = [0, 2], sizes = [112, 1], strides = [1, 1]} : vector<112x3xi32> to vector<112x1xi32>
    %45 = vector.broadcast %44 : vector<112x1xi32> to vector<112x6xi32>
    %46 = arith.cmpi eq, %45, %30 : vector<112x6xi32>
    %47 = arith.extui %46 : vector<112x6xi1> to vector<112x6xi32>
    %48 = arith.sitofp %47 : vector<112x6xi32> to vector<112x6xf32>
    %49 = arith.addf %43, %48 : vector<112x6xf32>
    %c0_26 = arith.constant 0 : index
    %c0_27 = arith.constant 0 : index
    %50 = vector.load %arg11[%c0_26, %c0_27] : memref<6x32xf32, #tpu.memory_space<vmem>>, vector<6x32xf32>
    %cst_28 = arith.constant dense<0.000000e+00> : vector<112x32xf32>
    %51 = tpu.matmul %49, %50, %cst_28 {dimension_numbers = #tpu.dot_dimension_numbers<[1], [0], [0], [1], [0, 0, 1, 1], [], []>} : vector<112x6xf32>, vector<6x32xf32>, vector<112x32xf32> -> vector<112x32xf32>
    %52 = tpu.concatenate %8, %28 in 1 : vector<112x16xf32>, vector<112x16xf32> -> vector<112x32xf32>
    %53 = arith.addf %52, %51 : vector<112x32xf32>
    %c0_29 = arith.constant 0 : index
    %c0_30 = arith.constant 0 : index
    %54 = vector.load %arg12[%c0_29, %c0_30] : memref<32x96xf32, #tpu.memory_space<vmem>>, vector<32x96xf32>
    %cst_31 = arith.constant dense<0.000000e+00> : vector<112x96xf32>
    %55 = tpu.matmul %53, %54, %cst_31 {dimension_numbers = #tpu.dot_dimension_numbers<[1], [0], [0], [1], [0, 0, 1, 1], [], []>} : vector<112x32xf32>, vector<32x96xf32>, vector<112x96xf32> -> vector<112x96xf32>
    %c0_32 = arith.constant 0 : index
    %c0_33 = arith.constant 0 : index
    %56 = vector.load %arg13[%c0_32, %c0_33] : memref<1x96xf32, #tpu.memory_space<vmem>>, vector<1x96xf32>
    %57 = vector.broadcast %56 : vector<1x96xf32> to vector<112x96xf32>
    %58 = arith.addf %55, %57 : vector<112x96xf32>
    %c0_34 = arith.constant 0 : index
    %c0_35 = arith.constant 0 : index
    %59 = vector.load %arg14[%c0_34, %c0_35] : memref<32x96xf32, #tpu.memory_space<vmem>>, vector<32x96xf32>
    %c0_36 = arith.constant 0 : index
    %c0_37 = arith.constant 0 : index
    %60 = vector.load %arg15[%c0_36, %c0_37] : memref<1x96xf32, #tpu.memory_space<vmem>>, vector<1x96xf32>
    %cst_38 = arith.constant 0.000000e+00 : f32
    %61 = vector.broadcast %cst_38 : f32 to vector<14x32xf32>
    %62 = vector.extract_strided_slice %58 {offsets = [0, 0], sizes = [14, 96], strides = [1, 1]} : vector<112x96xf32> to vector<14x96xf32>
    %cst_39 = arith.constant dense<0.000000e+00> : vector<14x96xf32>
    %63 = tpu.matmul %61, %59, %cst_39 {dimension_numbers = #tpu.dot_dimension_numbers<[1], [0], [0], [1], [0, 0, 1, 1], [], []>} : vector<14x32xf32>, vector<32x96xf32>, vector<14x96xf32> -> vector<14x96xf32>
    %64 = vector.broadcast %60 : vector<1x96xf32> to vector<14x96xf32>
    %65 = arith.addf %63, %64 : vector<14x96xf32>
    %66 = vector.extract_strided_slice %62 {offsets = [0, 0], sizes = [14, 32], strides = [1, 1]} : vector<14x96xf32> to vector<14x32xf32>
    %67 = vector.extract_strided_slice %65 {offsets = [0, 0], sizes = [14, 32], strides = [1, 1]} : vector<14x96xf32> to vector<14x32xf32>
    %68 = arith.addf %66, %67 : vector<14x32xf32>
    %69 = arith.negf %68 : vector<14x32xf32>
    %70 = math.exp %69 : vector<14x32xf32>
    %cst_40 = arith.constant 1.000000e+00 : f32
    %71 = vector.broadcast %cst_40 : f32 to vector<14x32xf32>
    %72 = arith.addf %71, %70 : vector<14x32xf32>
    %73 = arith.divf %71, %72 : vector<14x32xf32>
    %74 = vector.extract_strided_slice %62 {offsets = [0, 32], sizes = [14, 32], strides = [1, 1]} : vector<14x96xf32> to vector<14x32xf32>
    %75 = vector.extract_strided_slice %65 {offsets = [0, 32], sizes = [14, 32], strides = [1, 1]} : vector<14x96xf32> to vector<14x32xf32>
    %76 = arith.addf %74, %75 : vector<14x32xf32>
    %77 = arith.negf %76 : vector<14x32xf32>
    %78 = math.exp %77 : vector<14x32xf32>
    %cst_41 = arith.constant 1.000000e+00 : f32
    %79 = vector.broadcast %cst_41 : f32 to vector<14x32xf32>
    %80 = arith.addf %79, %78 : vector<14x32xf32>
    %81 = arith.divf %79, %80 : vector<14x32xf32>
    %82 = vector.extract_strided_slice %62 {offsets = [0, 64], sizes = [14, 32], strides = [1, 1]} : vector<14x96xf32> to vector<14x32xf32>
    %83 = vector.extract_strided_slice %65 {offsets = [0, 64], sizes = [14, 32], strides = [1, 1]} : vector<14x96xf32> to vector<14x32xf32>
    %84 = arith.mulf %73, %83 : vector<14x32xf32>
    %85 = arith.addf %82, %84 : vector<14x32xf32>
    %86 = math.tanh %85 : vector<14x32xf32>
    %cst_42 = arith.constant 1.000000e+00 : f32
    %87 = vector.broadcast %cst_42 : f32 to vector<14x32xf32>
    %88 = arith.subf %87, %81 : vector<14x32xf32>
    %89 = arith.mulf %88, %86 : vector<14x32xf32>
    %90 = arith.mulf %81, %61 : vector<14x32xf32>
    %91 = arith.addf %89, %90 : vector<14x32xf32>
    %92 = vector.extract_strided_slice %58 {offsets = [14, 0], sizes = [14, 96], strides = [1, 1]} : vector<112x96xf32> to vector<14x96xf32>
    %cst_43 = arith.constant dense<0.000000e+00> : vector<14x96xf32>
    %93 = tpu.matmul %91, %59, %cst_43 {dimension_numbers = #tpu.dot_dimension_numbers<[1], [0], [0], [1], [0, 0, 1, 1], [], []>} : vector<14x32xf32>, vector<32x96xf32>, vector<14x96xf32> -> vector<14x96xf32>
    %94 = vector.broadcast %60 : vector<1x96xf32> to vector<14x96xf32>
    %95 = arith.addf %93, %94 : vector<14x96xf32>
    %96 = vector.extract_strided_slice %92 {offsets = [0, 0], sizes = [14, 32], strides = [1, 1]} : vector<14x96xf32> to vector<14x32xf32>
    %97 = vector.extract_strided_slice %95 {offsets = [0, 0], sizes = [14, 32], strides = [1, 1]} : vector<14x96xf32> to vector<14x32xf32>
    %98 = arith.addf %96, %97 : vector<14x32xf32>
    %99 = arith.negf %98 : vector<14x32xf32>
    %100 = math.exp %99 : vector<14x32xf32>
    %cst_44 = arith.constant 1.000000e+00 : f32
    %101 = vector.broadcast %cst_44 : f32 to vector<14x32xf32>
    %102 = arith.addf %101, %100 : vector<14x32xf32>
    %103 = arith.divf %101, %102 : vector<14x32xf32>
    %104 = vector.extract_strided_slice %92 {offsets = [0, 32], sizes = [14, 32], strides = [1, 1]} : vector<14x96xf32> to vector<14x32xf32>
    %105 = vector.extract_strided_slice %95 {offsets = [0, 32], sizes = [14, 32], strides = [1, 1]} : vector<14x96xf32> to vector<14x32xf32>
    %106 = arith.addf %104, %105 : vector<14x32xf32>
    %107 = arith.negf %106 : vector<14x32xf32>
    %108 = math.exp %107 : vector<14x32xf32>
    %cst_45 = arith.constant 1.000000e+00 : f32
    %109 = vector.broadcast %cst_45 : f32 to vector<14x32xf32>
    %110 = arith.addf %109, %108 : vector<14x32xf32>
    %111 = arith.divf %109, %110 : vector<14x32xf32>
    %112 = vector.extract_strided_slice %92 {offsets = [0, 64], sizes = [14, 32], strides = [1, 1]} : vector<14x96xf32> to vector<14x32xf32>
    %113 = vector.extract_strided_slice %95 {offsets = [0, 64], sizes = [14, 32], strides = [1, 1]} : vector<14x96xf32> to vector<14x32xf32>
    %114 = arith.mulf %103, %113 : vector<14x32xf32>
    %115 = arith.addf %112, %114 : vector<14x32xf32>
    %116 = math.tanh %115 : vector<14x32xf32>
    %cst_46 = arith.constant 1.000000e+00 : f32
    %117 = vector.broadcast %cst_46 : f32 to vector<14x32xf32>
    %118 = arith.subf %117, %111 : vector<14x32xf32>
    %119 = arith.mulf %118, %116 : vector<14x32xf32>
    %120 = arith.mulf %111, %91 : vector<14x32xf32>
    %121 = arith.addf %119, %120 : vector<14x32xf32>
    %122 = vector.extract_strided_slice %58 {offsets = [28, 0], sizes = [14, 96], strides = [1, 1]} : vector<112x96xf32> to vector<14x96xf32>
    %cst_47 = arith.constant dense<0.000000e+00> : vector<14x96xf32>
    %123 = tpu.matmul %121, %59, %cst_47 {dimension_numbers = #tpu.dot_dimension_numbers<[1], [0], [0], [1], [0, 0, 1, 1], [], []>} : vector<14x32xf32>, vector<32x96xf32>, vector<14x96xf32> -> vector<14x96xf32>
    %124 = vector.broadcast %60 : vector<1x96xf32> to vector<14x96xf32>
    %125 = arith.addf %123, %124 : vector<14x96xf32>
    %126 = vector.extract_strided_slice %122 {offsets = [0, 0], sizes = [14, 32], strides = [1, 1]} : vector<14x96xf32> to vector<14x32xf32>
    %127 = vector.extract_strided_slice %125 {offsets = [0, 0], sizes = [14, 32], strides = [1, 1]} : vector<14x96xf32> to vector<14x32xf32>
    %128 = arith.addf %126, %127 : vector<14x32xf32>
    %129 = arith.negf %128 : vector<14x32xf32>
    %130 = math.exp %129 : vector<14x32xf32>
    %cst_48 = arith.constant 1.000000e+00 : f32
    %131 = vector.broadcast %cst_48 : f32 to vector<14x32xf32>
    %132 = arith.addf %131, %130 : vector<14x32xf32>
    %133 = arith.divf %131, %132 : vector<14x32xf32>
    %134 = vector.extract_strided_slice %122 {offsets = [0, 32], sizes = [14, 32], strides = [1, 1]} : vector<14x96xf32> to vector<14x32xf32>
    %135 = vector.extract_strided_slice %125 {offsets = [0, 32], sizes = [14, 32], strides = [1, 1]} : vector<14x96xf32> to vector<14x32xf32>
    %136 = arith.addf %134, %135 : vector<14x32xf32>
    %137 = arith.negf %136 : vector<14x32xf32>
    %138 = math.exp %137 : vector<14x32xf32>
    %cst_49 = arith.constant 1.000000e+00 : f32
    %139 = vector.broadcast %cst_49 : f32 to vector<14x32xf32>
    %140 = arith.addf %139, %138 : vector<14x32xf32>
    %141 = arith.divf %139, %140 : vector<14x32xf32>
    %142 = vector.extract_strided_slice %122 {offsets = [0, 64], sizes = [14, 32], strides = [1, 1]} : vector<14x96xf32> to vector<14x32xf32>
    %143 = vector.extract_strided_slice %125 {offsets = [0, 64], sizes = [14, 32], strides = [1, 1]} : vector<14x96xf32> to vector<14x32xf32>
    %144 = arith.mulf %133, %143 : vector<14x32xf32>
    %145 = arith.addf %142, %144 : vector<14x32xf32>
    %146 = math.tanh %145 : vector<14x32xf32>
    %cst_50 = arith.constant 1.000000e+00 : f32
    %147 = vector.broadcast %cst_50 : f32 to vector<14x32xf32>
    %148 = arith.subf %147, %141 : vector<14x32xf32>
    %149 = arith.mulf %148, %146 : vector<14x32xf32>
    %150 = arith.mulf %141, %121 : vector<14x32xf32>
    %151 = arith.addf %149, %150 : vector<14x32xf32>
    %152 = vector.extract_strided_slice %58 {offsets = [42, 0], sizes = [14, 96], strides = [1, 1]} : vector<112x96xf32> to vector<14x96xf32>
    %cst_51 = arith.constant dense<0.000000e+00> : vector<14x96xf32>
    %153 = tpu.matmul %151, %59, %cst_51 {dimension_numbers = #tpu.dot_dimension_numbers<[1], [0], [0], [1], [0, 0, 1, 1], [], []>} : vector<14x32xf32>, vector<32x96xf32>, vector<14x96xf32> -> vector<14x96xf32>
    %154 = vector.broadcast %60 : vector<1x96xf32> to vector<14x96xf32>
    %155 = arith.addf %153, %154 : vector<14x96xf32>
    %156 = vector.extract_strided_slice %152 {offsets = [0, 0], sizes = [14, 32], strides = [1, 1]} : vector<14x96xf32> to vector<14x32xf32>
    %157 = vector.extract_strided_slice %155 {offsets = [0, 0], sizes = [14, 32], strides = [1, 1]} : vector<14x96xf32> to vector<14x32xf32>
    %158 = arith.addf %156, %157 : vector<14x32xf32>
    %159 = arith.negf %158 : vector<14x32xf32>
    %160 = math.exp %159 : vector<14x32xf32>
    %cst_52 = arith.constant 1.000000e+00 : f32
    %161 = vector.broadcast %cst_52 : f32 to vector<14x32xf32>
    %162 = arith.addf %161, %160 : vector<14x32xf32>
    %163 = arith.divf %161, %162 : vector<14x32xf32>
    %164 = vector.extract_strided_slice %152 {offsets = [0, 32], sizes = [14, 32], strides = [1, 1]} : vector<14x96xf32> to vector<14x32xf32>
    %165 = vector.extract_strided_slice %155 {offsets = [0, 32], sizes = [14, 32], strides = [1, 1]} : vector<14x96xf32> to vector<14x32xf32>
    %166 = arith.addf %164, %165 : vector<14x32xf32>
    %167 = arith.negf %166 : vector<14x32xf32>
    %168 = math.exp %167 : vector<14x32xf32>
    %cst_53 = arith.constant 1.000000e+00 : f32
    %169 = vector.broadcast %cst_53 : f32 to vector<14x32xf32>
    %170 = arith.addf %169, %168 : vector<14x32xf32>
    %171 = arith.divf %169, %170 : vector<14x32xf32>
    %172 = vector.extract_strided_slice %152 {offsets = [0, 64], sizes = [14, 32], strides = [1, 1]} : vector<14x96xf32> to vector<14x32xf32>
    %173 = vector.extract_strided_slice %155 {offsets = [0, 64], sizes = [14, 32], strides = [1, 1]} : vector<14x96xf32> to vector<14x32xf32>
    %174 = arith.mulf %163, %173 : vector<14x32xf32>
    %175 = arith.addf %172, %174 : vector<14x32xf32>
    %176 = math.tanh %175 : vector<14x32xf32>
    %cst_54 = arith.constant 1.000000e+00 : f32
    %177 = vector.broadcast %cst_54 : f32 to vector<14x32xf32>
    %178 = arith.subf %177, %171 : vector<14x32xf32>
    %179 = arith.mulf %178, %176 : vector<14x32xf32>
    %180 = arith.mulf %171, %151 : vector<14x32xf32>
    %181 = arith.addf %179, %180 : vector<14x32xf32>
    %182 = vector.extract_strided_slice %58 {offsets = [56, 0], sizes = [14, 96], strides = [1, 1]} : vector<112x96xf32> to vector<14x96xf32>
    %cst_55 = arith.constant dense<0.000000e+00> : vector<14x96xf32>
    %183 = tpu.matmul %181, %59, %cst_55 {dimension_numbers = #tpu.dot_dimension_numbers<[1], [0], [0], [1], [0, 0, 1, 1], [], []>} : vector<14x32xf32>, vector<32x96xf32>, vector<14x96xf32> -> vector<14x96xf32>
    %184 = vector.broadcast %60 : vector<1x96xf32> to vector<14x96xf32>
    %185 = arith.addf %183, %184 : vector<14x96xf32>
    %186 = vector.extract_strided_slice %182 {offsets = [0, 0], sizes = [14, 32], strides = [1, 1]} : vector<14x96xf32> to vector<14x32xf32>
    %187 = vector.extract_strided_slice %185 {offsets = [0, 0], sizes = [14, 32], strides = [1, 1]} : vector<14x96xf32> to vector<14x32xf32>
    %188 = arith.addf %186, %187 : vector<14x32xf32>
    %189 = arith.negf %188 : vector<14x32xf32>
    %190 = math.exp %189 : vector<14x32xf32>
    %cst_56 = arith.constant 1.000000e+00 : f32
    %191 = vector.broadcast %cst_56 : f32 to vector<14x32xf32>
    %192 = arith.addf %191, %190 : vector<14x32xf32>
    %193 = arith.divf %191, %192 : vector<14x32xf32>
    %194 = vector.extract_strided_slice %182 {offsets = [0, 32], sizes = [14, 32], strides = [1, 1]} : vector<14x96xf32> to vector<14x32xf32>
    %195 = vector.extract_strided_slice %185 {offsets = [0, 32], sizes = [14, 32], strides = [1, 1]} : vector<14x96xf32> to vector<14x32xf32>
    %196 = arith.addf %194, %195 : vector<14x32xf32>
    %197 = arith.negf %196 : vector<14x32xf32>
    %198 = math.exp %197 : vector<14x32xf32>
    %cst_57 = arith.constant 1.000000e+00 : f32
    %199 = vector.broadcast %cst_57 : f32 to vector<14x32xf32>
    %200 = arith.addf %199, %198 : vector<14x32xf32>
    %201 = arith.divf %199, %200 : vector<14x32xf32>
    %202 = vector.extract_strided_slice %182 {offsets = [0, 64], sizes = [14, 32], strides = [1, 1]} : vector<14x96xf32> to vector<14x32xf32>
    %203 = vector.extract_strided_slice %185 {offsets = [0, 64], sizes = [14, 32], strides = [1, 1]} : vector<14x96xf32> to vector<14x32xf32>
    %204 = arith.mulf %193, %203 : vector<14x32xf32>
    %205 = arith.addf %202, %204 : vector<14x32xf32>
    %206 = math.tanh %205 : vector<14x32xf32>
    %cst_58 = arith.constant 1.000000e+00 : f32
    %207 = vector.broadcast %cst_58 : f32 to vector<14x32xf32>
    %208 = arith.subf %207, %201 : vector<14x32xf32>
    %209 = arith.mulf %208, %206 : vector<14x32xf32>
    %210 = arith.mulf %201, %181 : vector<14x32xf32>
    %211 = arith.addf %209, %210 : vector<14x32xf32>
    %212 = vector.extract_strided_slice %58 {offsets = [70, 0], sizes = [14, 96], strides = [1, 1]} : vector<112x96xf32> to vector<14x96xf32>
    %cst_59 = arith.constant dense<0.000000e+00> : vector<14x96xf32>
    %213 = tpu.matmul %211, %59, %cst_59 {dimension_numbers = #tpu.dot_dimension_numbers<[1], [0], [0], [1], [0, 0, 1, 1], [], []>} : vector<14x32xf32>, vector<32x96xf32>, vector<14x96xf32> -> vector<14x96xf32>
    %214 = vector.broadcast %60 : vector<1x96xf32> to vector<14x96xf32>
    %215 = arith.addf %213, %214 : vector<14x96xf32>
    %216 = vector.extract_strided_slice %212 {offsets = [0, 0], sizes = [14, 32], strides = [1, 1]} : vector<14x96xf32> to vector<14x32xf32>
    %217 = vector.extract_strided_slice %215 {offsets = [0, 0], sizes = [14, 32], strides = [1, 1]} : vector<14x96xf32> to vector<14x32xf32>
    %218 = arith.addf %216, %217 : vector<14x32xf32>
    %219 = arith.negf %218 : vector<14x32xf32>
    %220 = math.exp %219 : vector<14x32xf32>
    %cst_60 = arith.constant 1.000000e+00 : f32
    %221 = vector.broadcast %cst_60 : f32 to vector<14x32xf32>
    %222 = arith.addf %221, %220 : vector<14x32xf32>
    %223 = arith.divf %221, %222 : vector<14x32xf32>
    %224 = vector.extract_strided_slice %212 {offsets = [0, 32], sizes = [14, 32], strides = [1, 1]} : vector<14x96xf32> to vector<14x32xf32>
    %225 = vector.extract_strided_slice %215 {offsets = [0, 32], sizes = [14, 32], strides = [1, 1]} : vector<14x96xf32> to vector<14x32xf32>
    %226 = arith.addf %224, %225 : vector<14x32xf32>
    %227 = arith.negf %226 : vector<14x32xf32>
    %228 = math.exp %227 : vector<14x32xf32>
    %cst_61 = arith.constant 1.000000e+00 : f32
    %229 = vector.broadcast %cst_61 : f32 to vector<14x32xf32>
    %230 = arith.addf %229, %228 : vector<14x32xf32>
    %231 = arith.divf %229, %230 : vector<14x32xf32>
    %232 = vector.extract_strided_slice %212 {offsets = [0, 64], sizes = [14, 32], strides = [1, 1]} : vector<14x96xf32> to vector<14x32xf32>
    %233 = vector.extract_strided_slice %215 {offsets = [0, 64], sizes = [14, 32], strides = [1, 1]} : vector<14x96xf32> to vector<14x32xf32>
    %234 = arith.mulf %223, %233 : vector<14x32xf32>
    %235 = arith.addf %232, %234 : vector<14x32xf32>
    %236 = math.tanh %235 : vector<14x32xf32>
    %cst_62 = arith.constant 1.000000e+00 : f32
    %237 = vector.broadcast %cst_62 : f32 to vector<14x32xf32>
    %238 = arith.subf %237, %231 : vector<14x32xf32>
    %239 = arith.mulf %238, %236 : vector<14x32xf32>
    %240 = arith.mulf %231, %211 : vector<14x32xf32>
    %241 = arith.addf %239, %240 : vector<14x32xf32>
    %242 = vector.extract_strided_slice %58 {offsets = [84, 0], sizes = [14, 96], strides = [1, 1]} : vector<112x96xf32> to vector<14x96xf32>
    %cst_63 = arith.constant dense<0.000000e+00> : vector<14x96xf32>
    %243 = tpu.matmul %241, %59, %cst_63 {dimension_numbers = #tpu.dot_dimension_numbers<[1], [0], [0], [1], [0, 0, 1, 1], [], []>} : vector<14x32xf32>, vector<32x96xf32>, vector<14x96xf32> -> vector<14x96xf32>
    %244 = vector.broadcast %60 : vector<1x96xf32> to vector<14x96xf32>
    %245 = arith.addf %243, %244 : vector<14x96xf32>
    %246 = vector.extract_strided_slice %242 {offsets = [0, 0], sizes = [14, 32], strides = [1, 1]} : vector<14x96xf32> to vector<14x32xf32>
    %247 = vector.extract_strided_slice %245 {offsets = [0, 0], sizes = [14, 32], strides = [1, 1]} : vector<14x96xf32> to vector<14x32xf32>
    %248 = arith.addf %246, %247 : vector<14x32xf32>
    %249 = arith.negf %248 : vector<14x32xf32>
    %250 = math.exp %249 : vector<14x32xf32>
    %cst_64 = arith.constant 1.000000e+00 : f32
    %251 = vector.broadcast %cst_64 : f32 to vector<14x32xf32>
    %252 = arith.addf %251, %250 : vector<14x32xf32>
    %253 = arith.divf %251, %252 : vector<14x32xf32>
    %254 = vector.extract_strided_slice %242 {offsets = [0, 32], sizes = [14, 32], strides = [1, 1]} : vector<14x96xf32> to vector<14x32xf32>
    %255 = vector.extract_strided_slice %245 {offsets = [0, 32], sizes = [14, 32], strides = [1, 1]} : vector<14x96xf32> to vector<14x32xf32>
    %256 = arith.addf %254, %255 : vector<14x32xf32>
    %257 = arith.negf %256 : vector<14x32xf32>
    %258 = math.exp %257 : vector<14x32xf32>
    %cst_65 = arith.constant 1.000000e+00 : f32
    %259 = vector.broadcast %cst_65 : f32 to vector<14x32xf32>
    %260 = arith.addf %259, %258 : vector<14x32xf32>
    %261 = arith.divf %259, %260 : vector<14x32xf32>
    %262 = vector.extract_strided_slice %242 {offsets = [0, 64], sizes = [14, 32], strides = [1, 1]} : vector<14x96xf32> to vector<14x32xf32>
    %263 = vector.extract_strided_slice %245 {offsets = [0, 64], sizes = [14, 32], strides = [1, 1]} : vector<14x96xf32> to vector<14x32xf32>
    %264 = arith.mulf %253, %263 : vector<14x32xf32>
    %265 = arith.addf %262, %264 : vector<14x32xf32>
    %266 = math.tanh %265 : vector<14x32xf32>
    %cst_66 = arith.constant 1.000000e+00 : f32
    %267 = vector.broadcast %cst_66 : f32 to vector<14x32xf32>
    %268 = arith.subf %267, %261 : vector<14x32xf32>
    %269 = arith.mulf %268, %266 : vector<14x32xf32>
    %270 = arith.mulf %261, %241 : vector<14x32xf32>
    %271 = arith.addf %269, %270 : vector<14x32xf32>
    %272 = vector.extract_strided_slice %58 {offsets = [98, 0], sizes = [14, 96], strides = [1, 1]} : vector<112x96xf32> to vector<14x96xf32>
    %cst_67 = arith.constant dense<0.000000e+00> : vector<14x96xf32>
    %273 = tpu.matmul %271, %59, %cst_67 {dimension_numbers = #tpu.dot_dimension_numbers<[1], [0], [0], [1], [0, 0, 1, 1], [], []>} : vector<14x32xf32>, vector<32x96xf32>, vector<14x96xf32> -> vector<14x96xf32>
    %274 = vector.broadcast %60 : vector<1x96xf32> to vector<14x96xf32>
    %275 = arith.addf %273, %274 : vector<14x96xf32>
    %276 = vector.extract_strided_slice %272 {offsets = [0, 0], sizes = [14, 32], strides = [1, 1]} : vector<14x96xf32> to vector<14x32xf32>
    %277 = vector.extract_strided_slice %275 {offsets = [0, 0], sizes = [14, 32], strides = [1, 1]} : vector<14x96xf32> to vector<14x32xf32>
    %278 = arith.addf %276, %277 : vector<14x32xf32>
    %279 = arith.negf %278 : vector<14x32xf32>
    %280 = math.exp %279 : vector<14x32xf32>
    %cst_68 = arith.constant 1.000000e+00 : f32
    %281 = vector.broadcast %cst_68 : f32 to vector<14x32xf32>
    %282 = arith.addf %281, %280 : vector<14x32xf32>
    %283 = arith.divf %281, %282 : vector<14x32xf32>
    %284 = vector.extract_strided_slice %272 {offsets = [0, 32], sizes = [14, 32], strides = [1, 1]} : vector<14x96xf32> to vector<14x32xf32>
    %285 = vector.extract_strided_slice %275 {offsets = [0, 32], sizes = [14, 32], strides = [1, 1]} : vector<14x96xf32> to vector<14x32xf32>
    %286 = arith.addf %284, %285 : vector<14x32xf32>
    %287 = arith.negf %286 : vector<14x32xf32>
    %288 = math.exp %287 : vector<14x32xf32>
    %cst_69 = arith.constant 1.000000e+00 : f32
    %289 = vector.broadcast %cst_69 : f32 to vector<14x32xf32>
    %290 = arith.addf %289, %288 : vector<14x32xf32>
    %291 = arith.divf %289, %290 : vector<14x32xf32>
    %292 = vector.extract_strided_slice %272 {offsets = [0, 64], sizes = [14, 32], strides = [1, 1]} : vector<14x96xf32> to vector<14x32xf32>
    %293 = vector.extract_strided_slice %275 {offsets = [0, 64], sizes = [14, 32], strides = [1, 1]} : vector<14x96xf32> to vector<14x32xf32>
    %294 = arith.mulf %283, %293 : vector<14x32xf32>
    %295 = arith.addf %292, %294 : vector<14x32xf32>
    %296 = math.tanh %295 : vector<14x32xf32>
    %cst_70 = arith.constant 1.000000e+00 : f32
    %297 = vector.broadcast %cst_70 : f32 to vector<14x32xf32>
    %298 = arith.subf %297, %291 : vector<14x32xf32>
    %299 = arith.mulf %298, %296 : vector<14x32xf32>
    %300 = arith.mulf %291, %271 : vector<14x32xf32>
    %301 = arith.addf %299, %300 : vector<14x32xf32>
    %c0_71 = arith.constant 0 : index
    %c0_72 = arith.constant 0 : index
    %302 = vector.load %arg16[%c0_71, %c0_72] : memref<14x32xf32, #tpu.memory_space<vmem>>, vector<14x32xf32>
    tpu.vector_store %arg16[%c0_71, %c0_72], %301 {strides = array<i32>} : memref<14x32xf32, #tpu.memory_space<vmem>>, vector<14x32xf32>,
    return
  }
}

</mosaic_0001>

<llo_original>
// kernel: _lambda_.1
$region0: #{_lambda_.1}
  #allocation0 [shape = 'u32[]', space=smem, size = 0x4, offset = 0x4, fixed_abs, tag = 'smem constant byte address 0x4 - core index']
  #allocation1 [shape = 'u32[72,128]{1,0:T(1,128)}', space=vmem, size = 0x9000, scoped, tag = 'internal scratch']
  %s0 = inlined_call_operand.vmem [shape: f32[112,28], index: 0, kind: input, shape index: {}]
  %s1 = inlined_call_operand.vmem [shape: f32[112,28], index: 1, kind: input, shape index: {}]
  %s2 = inlined_call_operand.vmem [shape: s32[112,3], index: 2, kind: input, shape index: {}]
  %s3 = inlined_call_operand.vmem [shape: f32[4,16], index: 3, kind: input, shape index: {}]
  %s4 = inlined_call_operand.vmem [shape: f32[1,16], index: 4, kind: input, shape index: {}]
  %s5 = inlined_call_operand.vmem [shape: f32[28,112], index: 5, kind: input, shape index: {}]
  %s6 = inlined_call_operand.vmem [shape: f32[7,112], index: 6, kind: input, shape index: {}]
  %s7 = inlined_call_operand.vmem [shape: f32[1,112], index: 7, kind: input, shape index: {}]
  %s8 = inlined_call_operand.vmem [shape: f32[1,16], index: 8, kind: input, shape index: {}]
  %s9 = inlined_call_operand.vmem [shape: f32[28,7], index: 9, kind: input, shape index: {}]
  %s10 = inlined_call_operand.vmem [shape: f32[112,16], index: 10, kind: input, shape index: {}]
  %s11 = inlined_call_operand.vmem [shape: f32[6,32], index: 11, kind: input, shape index: {}]
  %s12 = inlined_call_operand.vmem [shape: f32[32,96], index: 12, kind: input, shape index: {}]
  %s13 = inlined_call_operand.vmem [shape: f32[1,96], index: 13, kind: input, shape index: {}]
  %s14 = inlined_call_operand.vmem [shape: f32[32,96], index: 14, kind: input, shape index: {}]
  %s15 = inlined_call_operand.vmem [shape: f32[1,96], index: 15, kind: input, shape index: {}]
  %s16 = inlined_call_operand.vmem [shape: f32[14,32], index: 16, kind: output, shape index: {}]
  %s17 = sld [smem:[#allocation0]]
  $region74: #{_lambda_.1} parent=0
    _
  %s19 = ssub.s32 1, %s17
  %s20 = scalar_select 0, %s19, %s17
  // Predicated region
  $region2: #{_lambda_.1} parent=0 // pred_check
    _
  $region3: #{_lambda_.1} parent=0 // pred_check_branch
    %22 = sbr.rel (0) target = $region5
  $region4: #{_lambda_.1} parent=0 // pred_region
    _
  $region5: #{_lambda_.1} parent=0 // pred_fallthru
    _
  // Predicated region
  $region6: #{_lambda_.1} parent=0 // pred_check
    _
  $region7: #{_lambda_.1} parent=0 // pred_check_branch
    %24 = sbr.rel (0) target = $region9
  $region8: #{_lambda_.1} parent=0 // pred_region
    _
  $region9: #{_lambda_.1} parent=0 // pred_fallthru
    _
  // Predicated region
  $region10: #{_lambda_.1} parent=0 // pred_check
    _
  $region11: #{_lambda_.1} parent=0 // pred_check_branch
    %26 = sbr.rel (0) target = $region13
  $region12: #{_lambda_.1} parent=0 // pred_region
    _
  $region13: #{_lambda_.1} parent=0 // pred_fallthru
    _
  // Predicated region
  $region14: #{_lambda_.1} parent=0 // pred_check
    _
  $region15: #{_lambda_.1} parent=0 // pred_check_branch
    %28 = sbr.rel (0) target = $region17
  $region16: #{_lambda_.1} parent=0 // pred_region
    _
  $region17: #{_lambda_.1} parent=0 // pred_fallthru
    _
  // Predicated region
  $region18: #{_lambda_.1} parent=0 // pred_check
    _
  $region19: #{_lambda_.1} parent=0 // pred_check_branch
    %30 = sbr.rel (0) target = $region21
  $region20: #{_lambda_.1} parent=0 // pred_region
    _
  $region21: #{_lambda_.1} parent=0 // pred_fallthru
    _
  // Predicated region
  $region22: #{_lambda_.1} parent=0 // pred_check
    _
  $region23: #{_lambda_.1} parent=0 // pred_check_branch
    %32 = sbr.rel (0) target = $region25
  $region24: #{_lambda_.1} parent=0 // pred_region
    _
  $region25: #{_lambda_.1} parent=0 // pred_fallthru
    _
  // Predicated region
  $region26: #{_lambda_.1} parent=0 // pred_check
    _
  $region27: #{_lambda_.1} parent=0 // pred_check_branch
    %34 = sbr.rel (0) target = $region29
  $region28: #{_lambda_.1} parent=0 // pred_region
    _
  $region29: #{_lambda_.1} parent=0 // pred_fallthru
    _
  // Predicated region
  $region30: #{_lambda_.1} parent=0 // pred_check
    _
  $region31: #{_lambda_.1} parent=0 // pred_check_branch
    %36 = sbr.rel (0) target = $region33
  $region32: #{_lambda_.1} parent=0 // pred_region
    _
  $region33: #{_lambda_.1} parent=0 // pred_fallthru
    _
  // Predicated region
  $region34: #{_lambda_.1} parent=0 // pred_check
    _
  $region35: #{_lambda_.1} parent=0 // pred_check_branch
    %38 = sbr.rel (0) target = $region37
  $region36: #{_lambda_.1} parent=0 // pred_region
    _
  $region37: #{_lambda_.1} parent=0 // pred_fallthru
    _
  // Predicated region
  $region38: #{_lambda_.1} parent=0 // pred_check
    _
  $region39: #{_lambda_.1} parent=0 // pred_check_branch
    %40 = sbr.rel (0) target = $region41
  $region40: #{_lambda_.1} parent=0 // pred_region
    _
  $region41: #{_lambda_.1} parent=0 // pred_fallthru
    _
  // Predicated region
  $region42: #{_lambda_.1} parent=0 // pred_check
    _
  $region43: #{_lambda_.1} parent=0 // pred_check_branch
    %42 = sbr.rel (0) target = $region45
  $region44: #{_lambda_.1} parent=0 // pred_region
    _
  $region45: #{_lambda_.1} parent=0 // pred_fallthru
    _
  // Predicated region
  $region46: #{_lambda_.1} parent=0 // pred_check
    _
  $region47: #{_lambda_.1} parent=0 // pred_check_branch
    %44 = sbr.rel (0) target = $region49
  $region48: #{_lambda_.1} parent=0 // pred_region
    _
  $region49: #{_lambda_.1} parent=0 // pred_fallthru
    _
  // Predicated region
  $region50: #{_lambda_.1} parent=0 // pred_check
    _
  $region51: #{_lambda_.1} parent=0 // pred_check_branch
    %46 = sbr.rel (0) target = $region53
  $region52: #{_lambda_.1} parent=0 // pred_region
    _
  $region53: #{_lambda_.1} parent=0 // pred_fallthru
    _
  // Predicated region
  $region54: #{_lambda_.1} parent=0 // pred_check
    _
  $region55: #{_lambda_.1} parent=0 // pred_check_branch
    %48 = sbr.rel (0) target = $region57
  $region56: #{_lambda_.1} parent=0 // pred_region
    _
  $region57: #{_lambda_.1} parent=0 // pred_fallthru
    _
  // Predicated region
  $region58: #{_lambda_.1} parent=0 // pred_check
    _
  $region59: #{_lambda_.1} parent=0 // pred_check_branch
    %50 = sbr.rel (0) target = $region61
  $region60: #{_lambda_.1} parent=0 // pred_region
    _
  $region61: #{_lambda_.1} parent=0 // pred_fallthru
    _
  // Predicated region
  $region62: #{_lambda_.1} parent=0 // pred_check
    _
  $region63: #{_lambda_.1} parent=0 // pred_check_branch
    %52 = sbr.rel (0) target = $region65
  $region64: #{_lambda_.1} parent=0 // pred_region
    _
  $region65: #{_lambda_.1} parent=0 // pred_fallthru
    _
  %v53 = vld [vmem:[%s0] sm:$0xff]
  %v54 = vld [vmem:[%s0 + $0x8] sm:$0xff]
  %v55 = vld [vmem:[%s0 + $0x10] sm:$0xff]
  %v56 = vld [vmem:[%s0 + $0x18] sm:$0xff]
  %v57 = vld [vmem:[%s0 + $0x20] sm:$0xff]
  %v58 = vld [vmem:[%s0 + $0x28] sm:$0xff]
  %v59 = vld [vmem:[%s0 + $0x30] sm:$0xff]
  %v60 = vld [vmem:[%s0 + $0x38] sm:$0xff]
  %v61 = vld [vmem:[%s0 + $0x40] sm:$0xff]
  %v62 = vld [vmem:[%s0 + $0x48] sm:$0xff]
  %v63 = vld [vmem:[%s0 + $0x50] sm:$0xff]
  %v64 = vld [vmem:[%s0 + $0x58] sm:$0xff]
  %v65 = vld [vmem:[%s0 + $0x60] sm:$0xff]
  %v66 = vld [vmem:[%s0 + $0x68] sm:$0xff]
  %v67 = vld [vmem:[%s1] sm:$0xff]
  %v68 = vld [vmem:[%s1 + $0x8] sm:$0xff]
  %v69 = vld [vmem:[%s1 + $0x10] sm:$0xff]
  %v70 = vld [vmem:[%s1 + $0x18] sm:$0xff]
  %v71 = vld [vmem:[%s1 + $0x20] sm:$0xff]
  %v72 = vld [vmem:[%s1 + $0x28] sm:$0xff]
  %v73 = vld [vmem:[%s1 + $0x30] sm:$0xff]
  %v74 = vld [vmem:[%s1 + $0x38] sm:$0xff]
  %v75 = vld [vmem:[%s1 + $0x40] sm:$0xff]
  %v76 = vld [vmem:[%s1 + $0x48] sm:$0xff]
  %v77 = vld [vmem:[%s1 + $0x50] sm:$0xff]
  %v78 = vld [vmem:[%s1 + $0x58] sm:$0xff]
  %v79 = vld [vmem:[%s1 + $0x60] sm:$0xff]
  %v80 = vld [vmem:[%s1 + $0x68] sm:$0xff]
  %v81 = vld [vmem:[%s3] sm:$0xf]
  %v82 = vld [vmem:[%s4] sm:$0x1]
  %v84 = vperm.slane %v82, 0
  %vm86 = vcmask 31744
  %v88 = vsel %vm86, %v53, 0
  %v91 = vsel %vm86, %v54, 0
  %v94 = vsel %vm86, %v55, 0
  %v97 = vsel %vm86, %v56, 0
  %v100 = vsel %vm86, %v57, 0
  %v103 = vsel %vm86, %v58, 0
  %v106 = vsel %vm86, %v59, 0
  %v109 = vsel %vm86, %v60, 0
  %v112 = vsel %vm86, %v61, 0
  %v115 = vsel %vm86, %v62, 0
  %v118 = vsel %vm86, %v63, 0
  %v121 = vsel %vm86, %v64, 0
  %v124 = vsel %vm86, %v65, 0
  %v127 = vsel %vm86, %v66, 0
  %vm129 = vcmask 1043456
  %v131 = vsel %vm129, %v81, 0
  %133 = vmatpush.msra.mxu0 0.0
  %134 = vmatpush.msra.mxu0 0.0
  %135 = vmatpush.msra.mxu0 0.0
  %136 = vmatpush.msra.mxu0 0.0
  %137 = vmatpush.msra.mxu0 0.0
  %138 = vmatpush.msra.mxu0 0.0
  %139 = vmatpush.msra.mxu0 0.0
  %140 = vmatpush.msra.mxu0 0.0
  %141 = vmatpush.msra.mxu0 0.0
  %142 = vmatpush.msra.mxu0 0.0
  %143 = vmatpush.msra.mxu0 0.0
  %144 = vmatpush.msra.mxu0 0.0
  %145 = vmatpush.msra.mxu0 0.0
  %146 = vmatpush.msra.mxu0 0.0
  %147 = vmatpush.msra.mxu0 0.0
  %148 = vmatpush.msra.mxu0 %v131
  %149 = vmatmul.f32.gmra.mxu0 %v88
  %v150 = vpop.f32.mrf.mxu0
  %v151 = vadd.f32 %v84, %v150
  %152 = vmatmul.f32.gmra.mxu0 %v91
  %v153 = vpop.f32.mrf.mxu0
  %v154 = vadd.f32 %v84, %v153
  %155 = vmatmul.f32.gmra.mxu0 %v94
  %v156 = vpop.f32.mrf.mxu0
  %v157 = vadd.f32 %v84, %v156
  %158 = vmatmul.f32.gmra.mxu0 %v97
  %v159 = vpop.f32.mrf.mxu0
  %v160 = vadd.f32 %v84, %v159
  %161 = vmatmul.f32.gmra.mxu0 %v100
  %v162 = vpop.f32.mrf.mxu0
  %v163 = vadd.f32 %v84, %v162
  %164 = vmatmul.f32.gmra.mxu0 %v103
  %v165 = vpop.f32.mrf.mxu0
  %v166 = vadd.f32 %v84, %v165
  %167 = vmatmul.f32.gmra.mxu0 %v106
  %v168 = vpop.f32.mrf.mxu0
  %v169 = vadd.f32 %v84, %v168
  %170 = vmatmul.f32.gmra.mxu0 %v109
  %v171 = vpop.f32.mrf.mxu0
  %v172 = vadd.f32 %v84, %v171
  %173 = vmatmul.f32.gmra.mxu0 %v112
  %v174 = vpop.f32.mrf.mxu0
  %v175 = vadd.f32 %v84, %v174
  %176 = vmatmul.f32.gmra.mxu0 %v115
  %v177 = vpop.f32.mrf.mxu0
  %v178 = vadd.f32 %v84, %v177
  %179 = vmatmul.f32.gmra.mxu0 %v118
  %v180 = vpop.f32.mrf.mxu0
  %v181 = vadd.f32 %v84, %v180
  %182 = vmatmul.f32.gmra.mxu0 %v121
  %v183 = vpop.f32.mrf.mxu0
  %v184 = vadd.f32 %v84, %v183
  %185 = vmatmul.f32.gmra.mxu0 %v124
  %v186 = vpop.f32.mrf.mxu0
  %v187 = vadd.f32 %v84, %v186
  %188 = vmatmul.f32.gmra.mxu0 %v127
  %v189 = vpop.f32.mrf.mxu0
  %v190 = vadd.f32 %v84, %v189
  %191 = vdwg.mxu0
  %v192 = vtanh.pop %v151
  %v193 = vtanh.pop %v154
  %v194 = vtanh.pop %v157
  %v195 = vtanh.pop %v160
  %v196 = vtanh.pop %v163
  %v197 = vtanh.pop %v166
  %v198 = vtanh.pop %v169
  %v199 = vtanh.pop %v172
  %v200 = vtanh.pop %v175
  %v201 = vtanh.pop %v178
  %v202 = vtanh.pop %v181
  %v203 = vtanh.pop %v184
  %v204 = vtanh.pop %v187
  %v205 = vtanh.pop %v190
  %v206 = vsub.f32 %v53, %v67
  %v207 = vsub.f32 %v54, %v68
  %v208 = vsub.f32 %v55, %v69
  %v209 = vsub.f32 %v56, %v70
  %v210 = vsub.f32 %v57, %v71
  %v211 = vsub.f32 %v58, %v72
  %v212 = vsub.f32 %v59, %v73
  %v213 = vsub.f32 %v60, %v74
  %v214 = vsub.f32 %v61, %v75
  %v215 = vsub.f32 %v62, %v76
  %v216 = vsub.f32 %v63, %v77
  %v217 = vsub.f32 %v64, %v78
  %v218 = vsub.f32 %v65, %v79
  %v219 = vsub.f32 %v66, %v80
  %v220 = vmul.f32 %v206, %v206
  %v221 = vmul.f32 %v207, %v207
  %v222 = vmul.f32 %v208, %v208
  %v223 = vmul.f32 %v209, %v209
  %v224 = vmul.f32 %v210, %v210
  %v225 = vmul.f32 %v211, %v211
  %v226 = vmul.f32 %v212, %v212
  %v227 = vmul.f32 %v213, %v213
  %v228 = vmul.f32 %v214, %v214
  %v229 = vmul.f32 %v215, %v215
  %v230 = vmul.f32 %v216, %v216
  %v231 = vmul.f32 %v217, %v217
  %v232 = vmul.f32 %v218, %v218
  %v233 = vmul.f32 %v219, %v219
  %v234 = vld [vmem:[%s9] sm:$0xff]
  %v235 = vld [vmem:[%s9 + $0x8] sm:$0xff]
  %v236 = vld [vmem:[%s9 + $0x10] sm:$0xff]
  %v237 = vld [vmem:[%s9 + $0x18] sm:$0xf]
  %vm238 = vcmask 228352
  %v240 = vsel %vm238, %v220, 0
  %v243 = vsel %vm238, %v221, 0
  %v246 = vsel %vm238, %v222, 0
  %v249 = vsel %vm238, %v223, 0
  %v252 = vsel %vm238, %v224, 0
  %v255 = vsel %vm238, %v225, 0
  %v258 = vsel %vm238, %v226, 0
  %v261 = vsel %vm238, %v227, 0
  %v264 = vsel %vm238, %v228, 0
  %v267 = vsel %vm238, %v229, 0
  %v270 = vsel %vm238, %v230, 0
  %v273 = vsel %vm238, %v231, 0
  %v276 = vsel %vm238, %v232, 0
  %v279 = vsel %vm238, %v233, 0
  %v282 = vsel %vm129, %v237, 0
  %284 = vmatpush.msra.mxu0 0.0
  %285 = vmatpush.msra.mxu0 0.0
  %286 = vmatpush.msra.mxu0 0.0
  %287 = vmatpush.msra.mxu0 0.0
  %288 = vmatpush.msra.mxu0 0.0
  %289 = vmatpush.msra.mxu0 0.0
  %290 = vmatpush.msra.mxu0 0.0
  %291 = vmatpush.msra.mxu0 0.0
  %292 = vmatpush.msra.mxu0 0.0
  %293 = vmatpush.msra.mxu0 0.0
  %294 = vmatpush.msra.mxu0 0.0
  %295 = vmatpush.msra.mxu0 0.0
  %296 = vmatpush.msra.mxu0 %v282
  %297 = vmatpush.msra.mxu0 %v236
  %298 = vmatpush.msra.mxu0 %v235
  %299 = vmatpush.msra.mxu0 %v234
  %300 = vmatmul.f32.gmra.mxu0 %v240
  %v301 = vpop.f32.mrf.mxu0
  %v302 = vadd.f32 0.0, %v301
  %303 = vmatmul.f32.gmra.mxu0 %v243
  %v304 = vpop.f32.mrf.mxu0
  %v305 = vadd.f32 0.0, %v304
  %306 = vmatmul.f32.gmra.mxu0 %v246
  %v307 = vpop.f32.mrf.mxu0
  %v308 = vadd.f32 0.0, %v307
  %309 = vmatmul.f32.gmra.mxu0 %v249
  %v310 = vpop.f32.mrf.mxu0
  %v311 = vadd.f32 0.0, %v310
  %312 = vmatmul.f32.gmra.mxu0 %v252
  %v313 = vpop.f32.mrf.mxu0
  %v314 = vadd.f32 0.0, %v313
  %315 = vmatmul.f32.gmra.mxu0 %v255
  %v316 = vpop.f32.mrf.mxu0
  %v317 = vadd.f32 0.0, %v316
  %318 = vmatmul.f32.gmra.mxu0 %v258
  %v319 = vpop.f32.mrf.mxu0
  %v320 = vadd.f32 0.0, %v319
  %321 = vmatmul.f32.gmra.mxu0 %v261
  %v322 = vpop.f32.mrf.mxu0
  %v323 = vadd.f32 0.0, %v322
  %324 = vmatmul.f32.gmra.mxu0 %v264
  %v325 = vpop.f32.mrf.mxu0
  %v326 = vadd.f32 0.0, %v325
  %327 = vmatmul.f32.gmra.mxu0 %v267
  %v328 = vpop.f32.mrf.mxu0
  %v329 = vadd.f32 0.0, %v328
  %330 = vmatmul.f32.gmra.mxu0 %v270
  %v331 = vpop.f32.mrf.mxu0
  %v332 = vadd.f32 0.0, %v331
  %333 = vmatmul.f32.gmra.mxu0 %v273
  %v334 = vpop.f32.mrf.mxu0
  %v335 = vadd.f32 0.0, %v334
  %336 = vmatmul.f32.gmra.mxu0 %v276
  %v337 = vpop.f32.mrf.mxu0
  %v338 = vadd.f32 0.0, %v337
  %339 = vmatmul.f32.gmra.mxu0 %v279
  %v340 = vpop.f32.mrf.mxu0
  %v341 = vadd.f32 0.0, %v340
  %342 = vdwg.mxu0
  %v343 = vrsqrt.pop %v302
  %v344 = vmul.f32 %v343, %v302
  %v345 = vmul.f32 %v344, %v343
  %v346 = vmul.f32 0.5, %v345
  %v347 = vsub.f32 1.5, %v346
  %v348 = vmul.f32 %v343, %v347
  %v349 = vmul.f32 %v302, %v348
  %vm350 = vcmp.eq.f32.partialorder %v302, inf
  %v351 = vsel %vm350, %v302, %v349
  %vm352 = vcmp.eq.f32.partialorder %v302, 0.0
  %v353 = vand.u32 %v302, 2147483648
  %v354 = vsel %vm352, %v353, %v351
  %v355 = vrsqrt.pop %v305
  %v356 = vmul.f32 %v355, %v305
  %v357 = vmul.f32 %v356, %v355
  %v358 = vmul.f32 0.5, %v357
  %v359 = vsub.f32 1.5, %v358
  %v360 = vmul.f32 %v355, %v359
  %v361 = vmul.f32 %v305, %v360
  %vm362 = vcmp.eq.f32.partialorder %v305, inf
  %v363 = vsel %vm362, %v305, %v361
  %vm364 = vcmp.eq.f32.partialorder %v305, 0.0
  %v365 = vand.u32 %v305, 2147483648
  %v366 = vsel %vm364, %v365, %v363
  %v367 = vrsqrt.pop %v308
  %v368 = vmul.f32 %v367, %v308
  %v369 = vmul.f32 %v368, %v367
  %v370 = vmul.f32 0.5, %v369
  %v371 = vsub.f32 1.5, %v370
  %v372 = vmul.f32 %v367, %v371
  %v373 = vmul.f32 %v308, %v372
  %vm374 = vcmp.eq.f32.partialorder %v308, inf
  %v375 = vsel %vm374, %v308, %v373
  %vm376 = vcmp.eq.f32.partialorder %v308, 0.0
  %v377 = vand.u32 %v308, 2147483648
  %v378 = vsel %vm376, %v377, %v375
  %v379 = vrsqrt.pop %v311
  %v380 = vmul.f32 %v379, %v311
  %v381 = vmul.f32 %v380, %v379
  %v382 = vmul.f32 0.5, %v381
  %v383 = vsub.f32 1.5, %v382
  %v384 = vmul.f32 %v379, %v383
  %v385 = vmul.f32 %v311, %v384
  %vm386 = vcmp.eq.f32.partialorder %v311, inf
  %v387 = vsel %vm386, %v311, %v385
  %vm388 = vcmp.eq.f32.partialorder %v311, 0.0
  %v389 = vand.u32 %v311, 2147483648
  %v390 = vsel %vm388, %v389, %v387
  %v391 = vrsqrt.pop %v314
  %v392 = vmul.f32 %v391, %v314
  %v393 = vmul.f32 %v392, %v391
  %v394 = vmul.f32 0.5, %v393
  %v395 = vsub.f32 1.5, %v394
  %v396 = vmul.f32 %v391, %v395
  %v397 = vmul.f32 %v314, %v396
  %vm398 = vcmp.eq.f32.partialorder %v314, inf
  %v399 = vsel %vm398, %v314, %v397
  %vm400 = vcmp.eq.f32.partialorder %v314, 0.0
  %v401 = vand.u32 %v314, 2147483648
  %v402 = vsel %vm400, %v401, %v399
  %v403 = vrsqrt.pop %v317
  %v404 = vmul.f32 %v403, %v317
  %v405 = vmul.f32 %v404, %v403
  %v406 = vmul.f32 0.5, %v405
  %v407 = vsub.f32 1.5, %v406
  %v408 = vmul.f32 %v403, %v407
  %v409 = vmul.f32 %v317, %v408
  %vm410 = vcmp.eq.f32.partialorder %v317, inf
  %v411 = vsel %vm410, %v317, %v409
  %vm412 = vcmp.eq.f32.partialorder %v317, 0.0
  %v413 = vand.u32 %v317, 2147483648
  %v414 = vsel %vm412, %v413, %v411
  %v415 = vrsqrt.pop %v320
  %v416 = vmul.f32 %v415, %v320
  %v417 = vmul.f32 %v416, %v415
  %v418 = vmul.f32 0.5, %v417
  %v419 = vsub.f32 1.5, %v418
  %v420 = vmul.f32 %v415, %v419
  %v421 = vmul.f32 %v320, %v420
  %vm422 = vcmp.eq.f32.partialorder %v320, inf
  %v423 = vsel %vm422, %v320, %v421
  %vm424 = vcmp.eq.f32.partialorder %v320, 0.0
  %v425 = vand.u32 %v320, 2147483648
  %v426 = vsel %vm424, %v425, %v423
  %v427 = vrsqrt.pop %v323
  %v428 = vmul.f32 %v427, %v323
  %v429 = vmul.f32 %v428, %v427
  %v430 = vmul.f32 0.5, %v429
  %v431 = vsub.f32 1.5, %v430
  %v432 = vmul.f32 %v427, %v431
  %v433 = vmul.f32 %v323, %v432
  %vm434 = vcmp.eq.f32.partialorder %v323, inf
  %v435 = vsel %vm434, %v323, %v433
  %vm436 = vcmp.eq.f32.partialorder %v323, 0.0
  %v437 = vand.u32 %v323, 2147483648
  %v438 = vsel %vm436, %v437, %v435
  %v439 = vrsqrt.pop %v326
  %v440 = vmul.f32 %v439, %v326
  %v441 = vmul.f32 %v440, %v439
  %v442 = vmul.f32 0.5, %v441
  %v443 = vsub.f32 1.5, %v442
  %v444 = vmul.f32 %v439, %v443
  %v445 = vmul.f32 %v326, %v444
  %vm446 = vcmp.eq.f32.partialorder %v326, inf
  %v447 = vsel %vm446, %v326, %v445
  %vm448 = vcmp.eq.f32.partialorder %v326, 0.0
  %v449 = vand.u32 %v326, 2147483648
  %v450 = vsel %vm448, %v449, %v447
  %v451 = vrsqrt.pop %v329
  %v452 = vmul.f32 %v451, %v329
  %v453 = vmul.f32 %v452, %v451
  %v454 = vmul.f32 0.5, %v453
  %v455 = vsub.f32 1.5, %v454
  %v456 = vmul.f32 %v451, %v455
  %v457 = vmul.f32 %v329, %v456
  %vm458 = vcmp.eq.f32.partialorder %v329, inf
  %v459 = vsel %vm458, %v329, %v457
  %vm460 = vcmp.eq.f32.partialorder %v329, 0.0
  %v461 = vand.u32 %v329, 2147483648
  %v462 = vsel %vm460, %v461, %v459
  %v463 = vrsqrt.pop %v332
  %v464 = vmul.f32 %v463, %v332
  %v465 = vmul.f32 %v464, %v463
  %v466 = vmul.f32 0.5, %v465
  %v467 = vsub.f32 1.5, %v466
  %v468 = vmul.f32 %v463, %v467
  %v469 = vmul.f32 %v332, %v468
  %vm470 = vcmp.eq.f32.partialorder %v332, inf
  %v471 = vsel %vm470, %v332, %v469
  %vm472 = vcmp.eq.f32.partialorder %v332, 0.0
  %v473 = vand.u32 %v332, 2147483648
  %v474 = vsel %vm472, %v473, %v471
  %v475 = vrsqrt.pop %v335
  %v476 = vmul.f32 %v475, %v335
  %v477 = vmul.f32 %v476, %v475
  %v478 = vmul.f32 0.5, %v477
  %v479 = vsub.f32 1.5, %v478
  %v480 = vmul.f32 %v475, %v479
  %v481 = vmul.f32 %v335, %v480
  %vm482 = vcmp.eq.f32.partialorder %v335, inf
  %v483 = vsel %vm482, %v335, %v481
  %vm484 = vcmp.eq.f32.partialorder %v335, 0.0
  %v485 = vand.u32 %v335, 2147483648
  %v486 = vsel %vm484, %v485, %v483
  %v487 = vrsqrt.pop %v338
  %v488 = vmul.f32 %v487, %v338
  %v489 = vmul.f32 %v488, %v487
  %v490 = vmul.f32 0.5, %v489
  %v491 = vsub.f32 1.5, %v490
  %v492 = vmul.f32 %v487, %v491
  %v493 = vmul.f32 %v338, %v492
  %vm494 = vcmp.eq.f32.partialorder %v338, inf
  %v495 = vsel %vm494, %v338, %v493
  %vm496 = vcmp.eq.f32.partialorder %v338, 0.0
  %v497 = vand.u32 %v338, 2147483648
  %v498 = vsel %vm496, %v497, %v495
  %v499 = vrsqrt.pop %v341
  %v500 = vmul.f32 %v499, %v341
  %v501 = vmul.f32 %v500, %v499
  %v502 = vmul.f32 0.5, %v501
  %v503 = vsub.f32 1.5, %v502
  %v504 = vmul.f32 %v499, %v503
  %v505 = vmul.f32 %v341, %v504
  %vm506 = vcmp.eq.f32.partialorder %v341, inf
  %v507 = vsel %vm506, %v341, %v505
  %vm508 = vcmp.eq.f32.partialorder %v341, 0.0
  %v509 = vand.u32 %v341, 2147483648
  %v510 = vsel %vm508, %v509, %v507
  %v511 = vld [vmem:[%s5] sm:$0xff]
  %v512 = vld [vmem:[%s5 + $0x8] sm:$0xff]
  %v513 = vld [vmem:[%s5 + $0x10] sm:$0xff]
  %v514 = vld [vmem:[%s5 + $0x18] sm:$0xf]
  %v515 = vld [vmem:[%s6] sm:$0x7f]
  %vm516 = vcmask 56320
  %v518 = vsel %vm516, %v354, 0
  %v521 = vsel %vm516, %v366, 0
  %v524 = vsel %vm516, %v378, 0
  %v527 = vsel %vm516, %v390, 0
  %v530 = vsel %vm516, %v402, 0
  %v533 = vsel %vm516, %v414, 0
  %v536 = vsel %vm516, %v426, 0
  %v539 = vsel %vm516, %v438, 0
  %v542 = vsel %vm516, %v450, 0
  %v545 = vsel %vm516, %v462, 0
  %v548 = vsel %vm516, %v474, 0
  %v551 = vsel %vm516, %v486, 0
  %v554 = vsel %vm516, %v498, 0
  %v557 = vsel %vm516, %v510, 0
  %vm559 = vcmask 1046528
  %v561 = vsel %vm559, %v515, 0
  %563 = vmatpush.msra.mxu0 0.0
  %564 = vmatpush.msra.mxu0 0.0
  %565 = vmatpush.msra.mxu0 0.0
  %566 = vmatpush.msra.mxu0 0.0
  %567 = vmatpush.msra.mxu0 0.0
  %568 = vmatpush.msra.mxu0 0.0
  %569 = vmatpush.msra.mxu0 0.0
  %570 = vmatpush.msra.mxu0 0.0
  %571 = vmatpush.msra.mxu0 0.0
  %572 = vmatpush.msra.mxu0 0.0
  %573 = vmatpush.msra.mxu0 0.0
  %574 = vmatpush.msra.mxu0 0.0
  %575 = vmatpush.msra.mxu0 0.0
  %576 = vmatpush.msra.mxu0 0.0
  %577 = vmatpush.msra.mxu0 0.0
  %578 = vmatpush.msra.mxu0 %v561
  %579 = vmatmul.f32.gmra.mxu0 %v518
  %v580 = vpop.f32.mrf.mxu0
  %v581 = vadd.f32 0.0, %v580
  %582 = vmatmul.f32.gmra.mxu0 %v521
  %v583 = vpop.f32.mrf.mxu0
  %v584 = vadd.f32 0.0, %v583
  %585 = vmatmul.f32.gmra.mxu0 %v524
  %v586 = vpop.f32.mrf.mxu0
  %v587 = vadd.f32 0.0, %v586
  %588 = vmatmul.f32.gmra.mxu0 %v527
  %v589 = vpop.f32.mrf.mxu0
  %v590 = vadd.f32 0.0, %v589
  %591 = vmatmul.f32.gmra.mxu0 %v530
  %v592 = vpop.f32.mrf.mxu0
  %v593 = vadd.f32 0.0, %v592
  %594 = vmatmul.f32.gmra.mxu0 %v533
  %v595 = vpop.f32.mrf.mxu0
  %v596 = vadd.f32 0.0, %v595
  %597 = vmatmul.f32.gmra.mxu0 %v536
  %v598 = vpop.f32.mrf.mxu0
  %v599 = vadd.f32 0.0, %v598
  %600 = vmatmul.f32.gmra.mxu0 %v539
  %v601 = vpop.f32.mrf.mxu0
  %v602 = vadd.f32 0.0, %v601
  %603 = vmatmul.f32.gmra.mxu0 %v542
  %v604 = vpop.f32.mrf.mxu0
  %v605 = vadd.f32 0.0, %v604
  %606 = vmatmul.f32.gmra.mxu0 %v545
  %v607 = vpop.f32.mrf.mxu0
  %v608 = vadd.f32 0.0, %v607
  %609 = vmatmul.f32.gmra.mxu0 %v548
  %v610 = vpop.f32.mrf.mxu0
  %v611 = vadd.f32 0.0, %v610
  %612 = vmatmul.f32.gmra.mxu0 %v551
  %v613 = vpop.f32.mrf.mxu0
  %v614 = vadd.f32 0.0, %v613
  %615 = vmatmul.f32.gmra.mxu0 %v554
  %v616 = vpop.f32.mrf.mxu0
  %v617 = vadd.f32 0.0, %v616
  %618 = vmatmul.f32.gmra.mxu0 %v557
  %v619 = vpop.f32.mrf.mxu0
  %v620 = vadd.f32 0.0, %v619
  %621 = vdwg.mxu0
  %v623 = vsel %vm238, %v206, 0
  %v626 = vsel %vm238, %v207, 0
  %v629 = vsel %vm238, %v208, 0
  %v632 = vsel %vm238, %v209, 0
  %v635 = vsel %vm238, %v210, 0
  %v638 = vsel %vm238, %v211, 0
  %v641 = vsel %vm238, %v212, 0
  %v644 = vsel %vm238, %v213, 0
  %v647 = vsel %vm238, %v214, 0
  %v650 = vsel %vm238, %v215, 0
  %v653 = vsel %vm238, %v216, 0
  %v656 = vsel %vm238, %v217, 0
  %v659 = vsel %vm238, %v218, 0
  %v662 = vsel %vm238, %v219, 0
  %v665 = vsel %vm129, %v514, 0
  %667 = vmatpush.msra.mxu0 0.0
  %668 = vmatpush.msra.mxu0 0.0
  %669 = vmatpush.msra.mxu0 0.0
  %670 = vmatpush.msra.mxu0 0.0
  %671 = vmatpush.msra.mxu0 0.0
  %672 = vmatpush.msra.mxu0 0.0
  %673 = vmatpush.msra.mxu0 0.0
  %674 = vmatpush.msra.mxu0 0.0
  %675 = vmatpush.msra.mxu0 0.0
  %676 = vmatpush.msra.mxu0 0.0
  %677 = vmatpush.msra.mxu0 0.0
  %678 = vmatpush.msra.mxu0 0.0
  %679 = vmatpush.msra.mxu0 %v665
  %680 = vmatpush.msra.mxu0 %v513
  %681 = vmatpush.msra.mxu0 %v512
  %682 = vmatpush.msra.mxu0 %v511
  %683 = vmatmul.f32.gmra.mxu0 %v623
  %v684 = vpop.f32.mrf.mxu0
  %v685 = vadd.f32 %v581, %v684
  %686 = vmatmul.f32.gmra.mxu0 %v626
  %v687 = vpop.f32.mrf.mxu0
  %v688 = vadd.f32 %v584, %v687
  %689 = vmatmul.f32.gmra.mxu0 %v629
  %v690 = vpop.f32.mrf.mxu0
  %v691 = vadd.f32 %v587, %v690
  %692 = vmatmul.f32.gmra.mxu0 %v632
  %v693 = vpop.f32.mrf.mxu0
  %v694 = vadd.f32 %v590, %v693
  %695 = vmatmul.f32.gmra.mxu0 %v635
  %v696 = vpop.f32.mrf.mxu0
  %v697 = vadd.f32 %v593, %v696
  %698 = vmatmul.f32.gmra.mxu0 %v638
  %v699 = vpop.f32.mrf.mxu0
  %v700 = vadd.f32 %v596, %v699
  %701 = vmatmul.f32.gmra.mxu0 %v641
  %v702 = vpop.f32.mrf.mxu0
  %v703 = vadd.f32 %v599, %v702
  %704 = vmatmul.f32.gmra.mxu0 %v644
  %v705 = vpop.f32.mrf.mxu0
  %v706 = vadd.f32 %v602, %v705
  %707 = vmatmul.f32.gmra.mxu0 %v647
  %v708 = vpop.f32.mrf.mxu0
  %v709 = vadd.f32 %v605, %v708
  %710 = vmatmul.f32.gmra.mxu0 %v650
  %v711 = vpop.f32.mrf.mxu0
  %v712 = vadd.f32 %v608, %v711
  %713 = vmatmul.f32.gmra.mxu0 %v653
  %v714 = vpop.f32.mrf.mxu0
  %v715 = vadd.f32 %v611, %v714
  %716 = vmatmul.f32.gmra.mxu0 %v656
  %v717 = vpop.f32.mrf.mxu0
  %v718 = vadd.f32 %v614, %v717
  %719 = vmatmul.f32.gmra.mxu0 %v659
  %v720 = vpop.f32.mrf.mxu0
  %v721 = vadd.f32 %v617, %v720
  %722 = vmatmul.f32.gmra.mxu0 %v662
  %v723 = vpop.f32.mrf.mxu0
  %v724 = vadd.f32 %v620, %v723
  %725 = vdwg.mxu0
  %v726 = vld [vmem:[%s7] sm:$0x1]
  %v728 = vperm.slane %v726, 0
  %v730 = vadd.f32 %v685, %v728
  %v731 = vadd.f32 %v688, %v728
  %v732 = vadd.f32 %v691, %v728
  %v733 = vadd.f32 %v694, %v728
  %v734 = vadd.f32 %v697, %v728
  %v735 = vadd.f32 %v700, %v728
  %v736 = vadd.f32 %v703, %v728
  %v737 = vadd.f32 %v706, %v728
  %v738 = vadd.f32 %v709, %v728
  %v739 = vadd.f32 %v712, %v728
  %v740 = vadd.f32 %v715, %v728
  %v741 = vadd.f32 %v718, %v728
  %v742 = vadd.f32 %v721, %v728
  %v743 = vadd.f32 %v724, %v728
  %v744 = vtanh.pop %v730
  %v745 = vtanh.pop %v731
  %v746 = vtanh.pop %v732
  %v747 = vtanh.pop %v733
  %v748 = vtanh.pop %v734
  %v749 = vtanh.pop %v735
  %v750 = vtanh.pop %v736
  %v751 = vtanh.pop %v737
  %v752 = vtanh.pop %v738
  %v753 = vtanh.pop %v739
  %v754 = vtanh.pop %v740
  %v755 = vtanh.pop %v741
  %v756 = vtanh.pop %v742
  %v757 = vtanh.pop %v743
  %v758 = vld [vmem:[%s10] sm:$0xff]
  %v759 = vld [vmem:[%s10 + $0x8] sm:$0xff]
  %v760 = vld [vmem:[%s10 + $0x10] sm:$0xff]
  %v761 = vld [vmem:[%s10 + $0x18] sm:$0xff]
  %v762 = vld [vmem:[%s10 + $0x20] sm:$0xff]
  %v763 = vld [vmem:[%s10 + $0x28] sm:$0xff]
  %v764 = vld [vmem:[%s10 + $0x30] sm:$0xff]
  %v765 = vld [vmem:[%s10 + $0x38] sm:$0xff]
  %v766 = vld [vmem:[%s10 + $0x40] sm:$0xff]
  %v767 = vld [vmem:[%s10 + $0x48] sm:$0xff]
  %v768 = vld [vmem:[%s10 + $0x50] sm:$0xff]
  %v769 = vld [vmem:[%s10 + $0x58] sm:$0xff]
  %v770 = vld [vmem:[%s10 + $0x60] sm:$0xff]
  %v771 = vld [vmem:[%s10 + $0x68] sm:$0xff]
  %vm772 = vcmask 916480
  %v774 = vsel %vm772, %v744, 0
  %v777 = vsel %vm772, %v745, 0
  %v780 = vsel %vm772, %v746, 0
  %v783 = vsel %vm772, %v747, 0
  %v786 = vsel %vm772, %v748, 0
  %v789 = vsel %vm772, %v749, 0
  %v792 = vsel %vm772, %v750, 0
  %v795 = vsel %vm772, %v751, 0
  %v798 = vsel %vm772, %v752, 0
  %v801 = vsel %vm772, %v753, 0
  %v804 = vsel %vm772, %v754, 0
  %v807 = vsel %vm772, %v755, 0
  %v810 = vsel %vm772, %v756, 0
  %v813 = vsel %vm772, %v757, 0
  %815 = vmatpush.msra.mxu0 0.0
  %816 = vmatpush.msra.mxu0 0.0
  %817 = vmatpush.msra.mxu0 %v771
  %818 = vmatpush.msra.mxu0 %v770
  %819 = vmatpush.msra.mxu0 %v769
  %820 = vmatpush.msra.mxu0 %v768
  %821 = vmatpush.msra.mxu0 %v767
  %822 = vmatpush.msra.mxu0 %v766
  %823 = vmatpush.msra.mxu0 %v765
  %824 = vmatpush.msra.mxu0 %v764
  %825 = vmatpush.msra.mxu0 %v763
  %826 = vmatpush.msra.mxu0 %v762
  %827 = vmatpush.msra.mxu0 %v761
  %828 = vmatpush.msra.mxu0 %v760
  %829 = vmatpush.msra.mxu0 %v759
  %830 = vmatpush.msra.mxu0 %v758
  %831 = vmatmul.f32.gmra.mxu0 %v774
  %v832 = vpop.f32.mrf.mxu0
  %v833 = vadd.f32 0.0, %v832
  %834 = vmatmul.f32.gmra.mxu0 %v777
  %v835 = vpop.f32.mrf.mxu0
  %v836 = vadd.f32 0.0, %v835
  %837 = vmatmul.f32.gmra.mxu0 %v780
  %v838 = vpop.f32.mrf.mxu0
  %v839 = vadd.f32 0.0, %v838
  %840 = vmatmul.f32.gmra.mxu0 %v783
  %v841 = vpop.f32.mrf.mxu0
  %v842 = vadd.f32 0.0, %v841
  %843 = vmatmul.f32.gmra.mxu0 %v786
  %v844 = vpop.f32.mrf.mxu0
  %v845 = vadd.f32 0.0, %v844
  %846 = vmatmul.f32.gmra.mxu0 %v789
  %v847 = vpop.f32.mrf.mxu0
  %v848 = vadd.f32 0.0, %v847
  %849 = vmatmul.f32.gmra.mxu0 %v792
  %v850 = vpop.f32.mrf.mxu0
  %v851 = vadd.f32 0.0, %v850
  %852 = vmatmul.f32.gmra.mxu0 %v795
  %v853 = vpop.f32.mrf.mxu0
  %v854 = vadd.f32 0.0, %v853
  %855 = vmatmul.f32.gmra.mxu0 %v798
  %v856 = vpop.f32.mrf.mxu0
  %v857 = vadd.f32 0.0, %v856
  %858 = vmatmul.f32.gmra.mxu0 %v801
  %v859 = vpop.f32.mrf.mxu0
  %v860 = vadd.f32 0.0, %v859
  %861 = vmatmul.f32.gmra.mxu0 %v804
  %v862 = vpop.f32.mrf.mxu0
  %v863 = vadd.f32 0.0, %v862
  %864 = vmatmul.f32.gmra.mxu0 %v807
  %v865 = vpop.f32.mrf.mxu0
  %v866 = vadd.f32 0.0, %v865
  %867 = vmatmul.f32.gmra.mxu0 %v810
  %v868 = vpop.f32.mrf.mxu0
  %v869 = vadd.f32 0.0, %v868
  %870 = vmatmul.f32.gmra.mxu0 %v813
  %v871 = vpop.f32.mrf.mxu0
  %v872 = vadd.f32 0.0, %v871
  %873 = vdwg.mxu0
  %v874 = vld [vmem:[%s8] sm:$0x1]
  %v875 = vtanh.pop %v874
  %v877 = vperm.slane %v875, 0
  %v879 = vsub.f32 %v833, %v877
  %v880 = vsub.f32 %v836, %v877
  %v881 = vsub.f32 %v839, %v877
  %v882 = vsub.f32 %v842, %v877
  %v883 = vsub.f32 %v845, %v877
  %v884 = vsub.f32 %v848, %v877
  %v885 = vsub.f32 %v851, %v877
  %v886 = vsub.f32 %v854, %v877
  %v887 = vsub.f32 %v857, %v877
  %v888 = vsub.f32 %v860, %v877
  %v889 = vsub.f32 %v863, %v877
  %v890 = vsub.f32 %v866, %v877
  %v891 = vsub.f32 %v869, %v877
  %v892 = vsub.f32 %v872, %v877
  %v893 = vld [vmem:[%s2] sm:$0xff]
  %v894 = vld [vmem:[%s2 + $0x8] sm:$0xff]
  %v895 = vld [vmem:[%s2 + $0x10] sm:$0xff]
  %v896 = vld [vmem:[%s2 + $0x18] sm:$0xff]
  %v897 = vld [vmem:[%s2 + $0x20] sm:$0xff]
  %v898 = vld [vmem:[%s2 + $0x28] sm:$0xff]
  %v899 = vld [vmem:[%s2 + $0x30] sm:$0xff]
  %v900 = vld [vmem:[%s2 + $0x38] sm:$0xff]
  %v901 = vld [vmem:[%s2 + $0x40] sm:$0xff]
  %v902 = vld [vmem:[%s2 + $0x48] sm:$0xff]
  %v903 = vld [vmem:[%s2 + $0x50] sm:$0xff]
  %v904 = vld [vmem:[%s2 + $0x58] sm:$0xff]
  %v905 = vld [vmem:[%s2 + $0x60] sm:$0xff]
  %v906 = vld [vmem:[%s2 + $0x68] sm:$0xff]
  %v907 = vlaneseq
  %v908 = vand.u32 %v907, 127
  %909 = vset.pattern.permute.xlu0 0
  %910 = vperm.xlu0 %909, %v893
  %v911 = vpop.permute.xlu0 %910
  %912 = vset.pattern.permute.xlu0 0
  %913 = vperm.xlu0 %912, %v894
  %v914 = vpop.permute.xlu0 %913
  %915 = vset.pattern.permute.xlu0 0
  %916 = vperm.xlu0 %915, %v895
  %v917 = vpop.permute.xlu0 %916
  %918 = vset.pattern.permute.xlu0 0
  %919 = vperm.xlu0 %918, %v896
  %v920 = vpop.permute.xlu0 %919
  %921 = vset.pattern.permute.xlu0 0
  %922 = vperm.xlu0 %921, %v897
  %v923 = vpop.permute.xlu0 %922
  %924 = vset.pattern.permute.xlu0 0
  %925 = vperm.xlu0 %924, %v898
  %v926 = vpop.permute.xlu0 %925
  %927 = vset.pattern.permute.xlu0 0
  %928 = vperm.xlu0 %927, %v899
  %v929 = vpop.permute.xlu0 %928
  %930 = vset.pattern.permute.xlu0 0
  %931 = vperm.xlu0 %930, %v900
  %v932 = vpop.permute.xlu0 %931
  %933 = vset.pattern.permute.xlu0 0
  %934 = vperm.xlu0 %933, %v901
  %v935 = vpop.permute.xlu0 %934
  %936 = vset.pattern.permute.xlu0 0
  %937 = vperm.xlu0 %936, %v902
  %v938 = vpop.permute.xlu0 %937
  %939 = vset.pattern.permute.xlu0 0
  %940 = vperm.xlu0 %939, %v903
  %v941 = vpop.permute.xlu0 %940
  %942 = vset.pattern.permute.xlu0 0
  %943 = vperm.xlu0 %942, %v904
  %v944 = vpop.permute.xlu0 %943
  %945 = vset.pattern.permute.xlu0 0
  %946 = vperm.xlu0 %945, %v905
  %v947 = vpop.permute.xlu0 %946
  %948 = vset.pattern.permute.xlu0 0
  %949 = vperm.xlu0 %948, %v906
  %v950 = vpop.permute.xlu0 %949
  %vm951 = vcmp.eq.s32.totalorder %v911, %v908
  %vm952 = vcmp.eq.s32.totalorder %v914, %v908
  %vm953 = vcmp.eq.s32.totalorder %v917, %v908
  %vm954 = vcmp.eq.s32.totalorder %v920, %v908
  %vm955 = vcmp.eq.s32.totalorder %v923, %v908
  %vm956 = vcmp.eq.s32.totalorder %v926, %v908
  %vm957 = vcmp.eq.s32.totalorder %v929, %v908
  %vm958 = vcmp.eq.s32.totalorder %v932, %v908
  %vm959 = vcmp.eq.s32.totalorder %v935, %v908
  %vm960 = vcmp.eq.s32.totalorder %v938, %v908
  %vm961 = vcmp.eq.s32.totalorder %v941, %v908
  %vm962 = vcmp.eq.s32.totalorder %v944, %v908
  %vm963 = vcmp.eq.s32.totalorder %v947, %v908
  %vm964 = vcmp.eq.s32.totalorder %v950, %v908
  %v965 = vsel %vm951, 1, 0
  %v966 = vsel %vm952, 1, 0
  %v967 = vsel %vm953, 1, 0
  %v968 = vsel %vm954, 1, 0
  %v969 = vsel %vm955, 1, 0
  %v970 = vsel %vm956, 1, 0
  %v971 = vsel %vm957, 1, 0
  %v972 = vsel %vm958, 1, 0
  %v973 = vsel %vm959, 1, 0
  %v974 = vsel %vm960, 1, 0
  %v975 = vsel %vm961, 1, 0
  %v976 = vsel %vm962, 1, 0
  %v977 = vsel %vm963, 1, 0
  %v978 = vsel %vm964, 1, 0
  %v979 = vcvt.s32.f32 %v965
  %v980 = vcvt.s32.f32 %v966
  %v981 = vcvt.s32.f32 %v967
  %v982 = vcvt.s32.f32 %v968
  %v983 = vcvt.s32.f32 %v969
  %v984 = vcvt.s32.f32 %v970
  %v985 = vcvt.s32.f32 %v971
  %v986 = vcvt.s32.f32 %v972
  %v987 = vcvt.s32.f32 %v973
  %v988 = vcvt.s32.f32 %v974
  %v989 = vcvt.s32.f32 %v975
  %v990 = vcvt.s32.f32 %v976
  %v991 = vcvt.s32.f32 %v977
  %v992 = vcvt.s32.f32 %v978
  %v993 = vadd.f32 %v979, 0.0
  %v994 = vadd.f32 %v980, 0.0
  %v995 = vadd.f32 %v981, 0.0
  %v996 = vadd.f32 %v982, 0.0
  %v997 = vadd.f32 %v983, 0.0
  %v998 = vadd.f32 %v984, 0.0
  %v999 = vadd.f32 %v985, 0.0
  %v1000 = vadd.f32 %v986, 0.0
  %v1001 = vadd.f32 %v987, 0.0
  %v1002 = vadd.f32 %v988, 0.0
  %v1003 = vadd.f32 %v989, 0.0
  %v1004 = vadd.f32 %v990, 0.0
  %v1005 = vadd.f32 %v991, 0.0
  %v1006 = vadd.f32 %v992, 0.0
  %1007 = vset.pattern.permute.xlu0 1
  %1008 = vperm.xlu0 %1007, %v893
  %v1009 = vpop.permute.xlu0 %1008
  %1010 = vset.pattern.permute.xlu0 1
  %1011 = vperm.xlu0 %1010, %v894
  %v1012 = vpop.permute.xlu0 %1011
  %1013 = vset.pattern.permute.xlu0 1
  %1014 = vperm.xlu0 %1013, %v895
  %v1015 = vpop.permute.xlu0 %1014
  %1016 = vset.pattern.permute.xlu0 1
  %1017 = vperm.xlu0 %1016, %v896
  %v1018 = vpop.permute.xlu0 %1017
  %1019 = vset.pattern.permute.xlu0 1
  %1020 = vperm.xlu0 %1019, %v897
  %v1021 = vpop.permute.xlu0 %1020
  %1022 = vset.pattern.permute.xlu0 1
  %1023 = vperm.xlu0 %1022, %v898
  %v1024 = vpop.permute.xlu0 %1023
  %1025 = vset.pattern.permute.xlu0 1
  %1026 = vperm.xlu0 %1025, %v899
  %v1027 = vpop.permute.xlu0 %1026
  %1028 = vset.pattern.permute.xlu0 1
  %1029 = vperm.xlu0 %1028, %v900
  %v1030 = vpop.permute.xlu0 %1029
  %1031 = vset.pattern.permute.xlu0 1
  %1032 = vperm.xlu0 %1031, %v901
  %v1033 = vpop.permute.xlu0 %1032
  %1034 = vset.pattern.permute.xlu0 1
  %1035 = vperm.xlu0 %1034, %v902
  %v1036 = vpop.permute.xlu0 %1035
  %1037 = vset.pattern.permute.xlu0 1
  %1038 = vperm.xlu0 %1037, %v903
  %v1039 = vpop.permute.xlu0 %1038
  %1040 = vset.pattern.permute.xlu0 1
  %1041 = vperm.xlu0 %1040, %v904
  %v1042 = vpop.permute.xlu0 %1041
  %1043 = vset.pattern.permute.xlu0 1
  %1044 = vperm.xlu0 %1043, %v905
  %v1045 = vpop.permute.xlu0 %1044
  %1046 = vset.pattern.permute.xlu0 1
  %1047 = vperm.xlu0 %1046, %v906
  %v1048 = vpop.permute.xlu0 %1047
  %vm1049 = vcmp.eq.s32.totalorder %v1009, %v908
  %vm1050 = vcmp.eq.s32.totalorder %v1012, %v908
  %vm1051 = vcmp.eq.s32.totalorder %v1015, %v908
  %vm1052 = vcmp.eq.s32.totalorder %v1018, %v908
  %vm1053 = vcmp.eq.s32.totalorder %v1021, %v908
  %vm1054 = vcmp.eq.s32.totalorder %v1024, %v908
  %vm1055 = vcmp.eq.s32.totalorder %v1027, %v908
  %vm1056 = vcmp.eq.s32.totalorder %v1030, %v908
  %vm1057 = vcmp.eq.s32.totalorder %v1033, %v908
  %vm1058 = vcmp.eq.s32.totalorder %v1036, %v908
  %vm1059 = vcmp.eq.s32.totalorder %v1039, %v908
  %vm1060 = vcmp.eq.s32.totalorder %v1042, %v908
  %vm1061 = vcmp.eq.s32.totalorder %v1045, %v908
  %vm1062 = vcmp.eq.s32.totalorder %v1048, %v908
  %v1063 = vsel %vm1049, 1, 0
  %v1064 = vsel %vm1050, 1, 0
  %v1065 = vsel %vm1051, 1, 0
  %v1066 = vsel %vm1052, 1, 0
  %v1067 = vsel %vm1053, 1, 0
  %v1068 = vsel %vm1054, 1, 0
  %v1069 = vsel %vm1055, 1, 0
  %v1070 = vsel %vm1056, 1, 0
  %v1071 = vsel %vm1057, 1, 0
  %v1072 = vsel %vm1058, 1, 0
  %v1073 = vsel %vm1059, 1, 0
  %v1074 = vsel %vm1060, 1, 0
  %v1075 = vsel %vm1061, 1, 0
  %v1076 = vsel %vm1062, 1, 0
  %v1077 = vcvt.s32.f32 %v1063
  %v1078 = vcvt.s32.f32 %v1064
  %v1079 = vcvt.s32.f32 %v1065
  %v1080 = vcvt.s32.f32 %v1066
  %v1081 = vcvt.s32.f32 %v1067
  %v1082 = vcvt.s32.f32 %v1068
  %v1083 = vcvt.s32.f32 %v1069
  %v1084 = vcvt.s32.f32 %v1070
  %v1085 = vcvt.s32.f32 %v1071
  %v1086 = vcvt.s32.f32 %v1072
  %v1087 = vcvt.s32.f32 %v1073
  %v1088 = vcvt.s32.f32 %v1074
  %v1089 = vcvt.s32.f32 %v1075
  %v1090 = vcvt.s32.f32 %v1076
  %v1091 = vadd.f32 %v993, %v1077
  %v1092 = vadd.f32 %v994, %v1078
  %v1093 = vadd.f32 %v995, %v1079
  %v1094 = vadd.f32 %v996, %v1080
  %v1095 = vadd.f32 %v997, %v1081
  %v1096 = vadd.f32 %v998, %v1082
  %v1097 = vadd.f32 %v999, %v1083
  %v1098 = vadd.f32 %v1000, %v1084
  %v1099 = vadd.f32 %v1001, %v1085
  %v1100 = vadd.f32 %v1002, %v1086
  %v1101 = vadd.f32 %v1003, %v1087
  %v1102 = vadd.f32 %v1004, %v1088
  %v1103 = vadd.f32 %v1005, %v1089
  %v1104 = vadd.f32 %v1006, %v1090
  %1105 = vset.pattern.permute.xlu0 2
  %1106 = vperm.xlu0 %1105, %v893
  %v1107 = vpop.permute.xlu0 %1106
  %1108 = vset.pattern.permute.xlu0 2
  %1109 = vperm.xlu0 %1108, %v894
  %v1110 = vpop.permute.xlu0 %1109
  %1111 = vset.pattern.permute.xlu0 2
  %1112 = vperm.xlu0 %1111, %v895
  %v1113 = vpop.permute.xlu0 %1112
  %1114 = vset.pattern.permute.xlu0 2
  %1115 = vperm.xlu0 %1114, %v896
  %v1116 = vpop.permute.xlu0 %1115
  %1117 = vset.pattern.permute.xlu0 2
  %1118 = vperm.xlu0 %1117, %v897
  %v1119 = vpop.permute.xlu0 %1118
  %1120 = vset.pattern.permute.xlu0 2
  %1121 = vperm.xlu0 %1120, %v898
  %v1122 = vpop.permute.xlu0 %1121
  %1123 = vset.pattern.permute.xlu0 2
  %1124 = vperm.xlu0 %1123, %v899
  %v1125 = vpop.permute.xlu0 %1124
  %1126 = vset.pattern.permute.xlu0 2
  %1127 = vperm.xlu0 %1126, %v900
  %v1128 = vpop.permute.xlu0 %1127
  %1129 = vset.pattern.permute.xlu0 2
  %1130 = vperm.xlu0 %1129, %v901
  %v1131 = vpop.permute.xlu0 %1130
  %1132 = vset.pattern.permute.xlu0 2
  %1133 = vperm.xlu0 %1132, %v902
  %v1134 = vpop.permute.xlu0 %1133
  %1135 = vset.pattern.permute.xlu0 2
  %1136 = vperm.xlu0 %1135, %v903
  %v1137 = vpop.permute.xlu0 %1136
  %1138 = vset.pattern.permute.xlu0 2
  %1139 = vperm.xlu0 %1138, %v904
  %v1140 = vpop.permute.xlu0 %1139
  %1141 = vset.pattern.permute.xlu0 2
  %1142 = vperm.xlu0 %1141, %v905
  %v1143 = vpop.permute.xlu0 %1142
  %1144 = vset.pattern.permute.xlu0 2
  %1145 = vperm.xlu0 %1144, %v906
  %v1146 = vpop.permute.xlu0 %1145
  %vm1147 = vcmp.eq.s32.totalorder %v1107, %v908
  %vm1148 = vcmp.eq.s32.totalorder %v1110, %v908
  %vm1149 = vcmp.eq.s32.totalorder %v1113, %v908
  %vm1150 = vcmp.eq.s32.totalorder %v1116, %v908
  %vm1151 = vcmp.eq.s32.totalorder %v1119, %v908
  %vm1152 = vcmp.eq.s32.totalorder %v1122, %v908
  %vm1153 = vcmp.eq.s32.totalorder %v1125, %v908
  %vm1154 = vcmp.eq.s32.totalorder %v1128, %v908
  %vm1155 = vcmp.eq.s32.totalorder %v1131, %v908
  %vm1156 = vcmp.eq.s32.totalorder %v1134, %v908
  %vm1157 = vcmp.eq.s32.totalorder %v1137, %v908
  %vm1158 = vcmp.eq.s32.totalorder %v1140, %v908
  %vm1159 = vcmp.eq.s32.totalorder %v1143, %v908
  %vm1160 = vcmp.eq.s32.totalorder %v1146, %v908
  %v1161 = vsel %vm1147, 1, 0
  %v1162 = vsel %vm1148, 1, 0
  %v1163 = vsel %vm1149, 1, 0
  %v1164 = vsel %vm1150, 1, 0
  %v1165 = vsel %vm1151, 1, 0
  %v1166 = vsel %vm1152, 1, 0
  %v1167 = vsel %vm1153, 1, 0
  %v1168 = vsel %vm1154, 1, 0
  %v1169 = vsel %vm1155, 1, 0
  %v1170 = vsel %vm1156, 1, 0
  %v1171 = vsel %vm1157, 1, 0
  %v1172 = vsel %vm1158, 1, 0
  %v1173 = vsel %vm1159, 1, 0
  %v1174 = vsel %vm1160, 1, 0
  %v1175 = vcvt.s32.f32 %v1161
  %v1176 = vcvt.s32.f32 %v1162
  %v1177 = vcvt.s32.f32 %v1163
  %v1178 = vcvt.s32.f32 %v1164
  %v1179 = vcvt.s32.f32 %v1165
  %v1180 = vcvt.s32.f32 %v1166
  %v1181 = vcvt.s32.f32 %v1167
  %v1182 = vcvt.s32.f32 %v1168
  %v1183 = vcvt.s32.f32 %v1169
  %v1184 = vcvt.s32.f32 %v1170
  %v1185 = vcvt.s32.f32 %v1171
  %v1186 = vcvt.s32.f32 %v1172
  %v1187 = vcvt.s32.f32 %v1173
  %v1188 = vcvt.s32.f32 %v1174
  %v1189 = vadd.f32 %v1091, %v1175
  %v1190 = vadd.f32 %v1092, %v1176
  %v1191 = vadd.f32 %v1093, %v1177
  %v1192 = vadd.f32 %v1094, %v1178
  %v1193 = vadd.f32 %v1095, %v1179
  %v1194 = vadd.f32 %v1096, %v1180
  %v1195 = vadd.f32 %v1097, %v1181
  %v1196 = vadd.f32 %v1098, %v1182
  %v1197 = vadd.f32 %v1099, %v1183
  %v1198 = vadd.f32 %v1100, %v1184
  %v1199 = vadd.f32 %v1101, %v1185
  %v1200 = vadd.f32 %v1102, %v1186
  %v1201 = vadd.f32 %v1103, %v1187
  %v1202 = vadd.f32 %v1104, %v1188
  %v1203 = vld [vmem:[%s11] sm:$0x3f]
  %vm1204 = vcmask 48128
  %v1206 = vsel %vm1204, %v1189, 0
  %v1209 = vsel %vm1204, %v1190, 0
  %v1212 = vsel %vm1204, %v1191, 0
  %v1215 = vsel %vm1204, %v1192, 0
  %v1218 = vsel %vm1204, %v1193, 0
  %v1221 = vsel %vm1204, %v1194, 0
  %v1224 = vsel %vm1204, %v1195, 0
  %v1227 = vsel %vm1204, %v1196, 0
  %v1230 = vsel %vm1204, %v1197, 0
  %v1233 = vsel %vm1204, %v1198, 0
  %v1236 = vsel %vm1204, %v1199, 0
  %v1239 = vsel %vm1204, %v1200, 0
  %v1242 = vsel %vm1204, %v1201, 0
  %v1245 = vsel %vm1204, %v1202, 0
  %vm1247 = vcmask 1045504
  %v1249 = vsel %vm1247, %v1203, 0
  %1251 = vmatpush.msra.mxu0 0.0
  %1252 = vmatpush.msra.mxu0 0.0
  %1253 = vmatpush.msra.mxu0 0.0
  %1254 = vmatpush.msra.mxu0 0.0
  %1255 = vmatpush.msra.mxu0 0.0
  %1256 = vmatpush.msra.mxu0 0.0
  %1257 = vmatpush.msra.mxu0 0.0
  %1258 = vmatpush.msra.mxu0 0.0
  %1259 = vmatpush.msra.mxu0 0.0
  %1260 = vmatpush.msra.mxu0 0.0
  %1261 = vmatpush.msra.mxu0 0.0
  %1262 = vmatpush.msra.mxu0 0.0
  %1263 = vmatpush.msra.mxu0 0.0
  %1264 = vmatpush.msra.mxu0 0.0
  %1265 = vmatpush.msra.mxu0 0.0
  %1266 = vmatpush.msra.mxu0 %v1249
  %1267 = vmatmul.f32.gmra.mxu0 %v1206
  %v1268 = vpop.f32.mrf.mxu0
  %v1269 = vadd.f32 0.0, %v1268
  %1270 = vmatmul.f32.gmra.mxu0 %v1209
  %v1271 = vpop.f32.mrf.mxu0
  %v1272 = vadd.f32 0.0, %v1271
  %1273 = vmatmul.f32.gmra.mxu0 %v1212
  %v1274 = vpop.f32.mrf.mxu0
  %v1275 = vadd.f32 0.0, %v1274
  %1276 = vmatmul.f32.gmra.mxu0 %v1215
  %v1277 = vpop.f32.mrf.mxu0
  %v1278 = vadd.f32 0.0, %v1277
  %1279 = vmatmul.f32.gmra.mxu0 %v1218
  %v1280 = vpop.f32.mrf.mxu0
  %v1281 = vadd.f32 0.0, %v1280
  %1282 = vmatmul.f32.gmra.mxu0 %v1221
  %v1283 = vpop.f32.mrf.mxu0
  %v1284 = vadd.f32 0.0, %v1283
  %1285 = vmatmul.f32.gmra.mxu0 %v1224
  %v1286 = vpop.f32.mrf.mxu0
  %v1287 = vadd.f32 0.0, %v1286
  %1288 = vmatmul.f32.gmra.mxu0 %v1227
  %v1289 = vpop.f32.mrf.mxu0
  %v1290 = vadd.f32 0.0, %v1289
  %1291 = vmatmul.f32.gmra.mxu0 %v1230
  %v1292 = vpop.f32.mrf.mxu0
  %v1293 = vadd.f32 0.0, %v1292
  %1294 = vmatmul.f32.gmra.mxu0 %v1233
  %v1295 = vpop.f32.mrf.mxu0
  %v1296 = vadd.f32 0.0, %v1295
  %1297 = vmatmul.f32.gmra.mxu0 %v1236
  %v1298 = vpop.f32.mrf.mxu0
  %v1299 = vadd.f32 0.0, %v1298
  %1300 = vmatmul.f32.gmra.mxu0 %v1239
  %v1301 = vpop.f32.mrf.mxu0
  %v1302 = vadd.f32 0.0, %v1301
  %1303 = vmatmul.f32.gmra.mxu0 %v1242
  %v1304 = vpop.f32.mrf.mxu0
  %v1305 = vadd.f32 0.0, %v1304
  %1306 = vmatmul.f32.gmra.mxu0 %v1245
  %v1307 = vpop.f32.mrf.mxu0
  %v1308 = vadd.f32 0.0, %v1307
  %1309 = vdwg.mxu0
  %1324 = vrot.lane.b32.xlu0 %v879, 16
  %v1325 = vpop.permute.xlu0 %1324
  %1326 = vrot.lane.b32.xlu0 %v880, 16
  %v1327 = vpop.permute.xlu0 %1326
  %1328 = vrot.lane.b32.xlu0 %v881, 16
  %v1329 = vpop.permute.xlu0 %1328
  %1330 = vrot.lane.b32.xlu0 %v882, 16
  %v1331 = vpop.permute.xlu0 %1330
  %1332 = vrot.lane.b32.xlu0 %v883, 16
  %v1333 = vpop.permute.xlu0 %1332
  %1334 = vrot.lane.b32.xlu0 %v884, 16
  %v1335 = vpop.permute.xlu0 %1334
  %1336 = vrot.lane.b32.xlu0 %v885, 16
  %v1337 = vpop.permute.xlu0 %1336
  %1338 = vrot.lane.b32.xlu0 %v886, 16
  %v1339 = vpop.permute.xlu0 %1338
  %1340 = vrot.lane.b32.xlu0 %v887, 16
  %v1341 = vpop.permute.xlu0 %1340
  %1342 = vrot.lane.b32.xlu0 %v888, 16
  %v1343 = vpop.permute.xlu0 %1342
  %1344 = vrot.lane.b32.xlu0 %v889, 16
  %v1345 = vpop.permute.xlu0 %1344
  %1346 = vrot.lane.b32.xlu0 %v890, 16
  %v1347 = vpop.permute.xlu0 %1346
  %1348 = vrot.lane.b32.xlu0 %v891, 16
  %v1349 = vpop.permute.xlu0 %1348
  %1350 = vrot.lane.b32.xlu0 %v892, 16
  %v1351 = vpop.permute.xlu0 %1350
  %vm1366 = vcmask 130048
  %v1367 = vsel %vm1366, %v192, %v1325
  %v1368 = vsel %vm1366, %v193, %v1327
  %v1369 = vsel %vm1366, %v194, %v1329
  %v1370 = vsel %vm1366, %v195, %v1331
  %v1371 = vsel %vm1366, %v196, %v1333
  %v1372 = vsel %vm1366, %v197, %v1335
  %v1373 = vsel %vm1366, %v198, %v1337
  %v1374 = vsel %vm1366, %v199, %v1339
  %v1375 = vsel %vm1366, %v200, %v1341
  %v1376 = vsel %vm1366, %v201, %v1343
  %v1377 = vsel %vm1366, %v202, %v1345
  %v1378 = vsel %vm1366, %v203, %v1347
  %v1379 = vsel %vm1366, %v204, %v1349
  %v1380 = vsel %vm1366, %v205, %v1351
  %v1381 = vadd.f32 %v1367, %v1269
  %v1382 = vadd.f32 %v1368, %v1272
  %v1383 = vadd.f32 %v1369, %v1275
  %v1384 = vadd.f32 %v1370, %v1278
  %v1385 = vadd.f32 %v1371, %v1281
  %v1386 = vadd.f32 %v1372, %v1284
  %v1387 = vadd.f32 %v1373, %v1287
  %v1388 = vadd.f32 %v1374, %v1290
  %v1389 = vadd.f32 %v1375, %v1293
  %v1390 = vadd.f32 %v1376, %v1296
  %v1391 = vadd.f32 %v1377, %v1299
  %v1392 = vadd.f32 %v1378, %v1302
  %v1393 = vadd.f32 %v1379, %v1305
  %v1394 = vadd.f32 %v1380, %v1308
  %v1395 = vld [vmem:[%s12] sm:$0xff]
  %v1396 = vld [vmem:[%s12 + $0x8] sm:$0xff]
  %v1397 = vld [vmem:[%s12 + $0x10] sm:$0xff]
  %v1398 = vld [vmem:[%s12 + $0x18] sm:$0xff]
  %v1399 = vld [vmem:[%s13] sm:$0x1]
  %v1401 = vperm.slane %v1399, 0
  %vm1403 = vcmask 261120
  %v1405 = vsel %vm1403, %v1381, 0
  %v1408 = vsel %vm1403, %v1382, 0
  %v1411 = vsel %vm1403, %v1383, 0
  %v1414 = vsel %vm1403, %v1384, 0
  %v1417 = vsel %vm1403, %v1385, 0
  %v1420 = vsel %vm1403, %v1386, 0
  %v1423 = vsel %vm1403, %v1387, 0
  %v1426 = vsel %vm1403, %v1388, 0
  %v1429 = vsel %vm1403, %v1389, 0
  %v1432 = vsel %vm1403, %v1390, 0
  %v1435 = vsel %vm1403, %v1391, 0
  %v1438 = vsel %vm1403, %v1392, 0
  %v1441 = vsel %vm1403, %v1393, 0
  %v1444 = vsel %vm1403, %v1394, 0
  %1446 = vmatpush.msra.mxu0 0.0
  %1447 = vmatpush.msra.mxu0 0.0
  %1448 = vmatpush.msra.mxu0 0.0
  %1449 = vmatpush.msra.mxu0 0.0
  %1450 = vmatpush.msra.mxu0 0.0
  %1451 = vmatpush.msra.mxu0 0.0
  %1452 = vmatpush.msra.mxu0 0.0
  %1453 = vmatpush.msra.mxu0 0.0
  %1454 = vmatpush.msra.mxu0 0.0
  %1455 = vmatpush.msra.mxu0 0.0
  %1456 = vmatpush.msra.mxu0 0.0
  %1457 = vmatpush.msra.mxu0 0.0
  %1458 = vmatpush.msra.mxu0 %v1398
  %1459 = vmatpush.msra.mxu0 %v1397
  %1460 = vmatpush.msra.mxu0 %v1396
  %1461 = vmatpush.msra.mxu0 %v1395
  %1462 = vmatmul.f32.gmra.mxu0 %v1405
  %v1463 = vpop.f32.mrf.mxu0
  %v1464 = vadd.f32 %v1401, %v1463
  %1465 = vmatmul.f32.gmra.mxu0 %v1408
  %v1466 = vpop.f32.mrf.mxu0
  %v1467 = vadd.f32 %v1401, %v1466
  %1468 = vmatmul.f32.gmra.mxu0 %v1411
  %v1469 = vpop.f32.mrf.mxu0
  %v1470 = vadd.f32 %v1401, %v1469
  %1471 = vmatmul.f32.gmra.mxu0 %v1414
  %v1472 = vpop.f32.mrf.mxu0
  %v1473 = vadd.f32 %v1401, %v1472
  %1474 = vmatmul.f32.gmra.mxu0 %v1417
  %v1475 = vpop.f32.mrf.mxu0
  %v1476 = vadd.f32 %v1401, %v1475
  %1477 = vmatmul.f32.gmra.mxu0 %v1420
  %v1478 = vpop.f32.mrf.mxu0
  %v1479 = vadd.f32 %v1401, %v1478
  %1480 = vmatmul.f32.gmra.mxu0 %v1423
  %v1481 = vpop.f32.mrf.mxu0
  %v1482 = vadd.f32 %v1401, %v1481
  %1483 = vmatmul.f32.gmra.mxu0 %v1426
  %v1484 = vpop.f32.mrf.mxu0
  %v1485 = vadd.f32 %v1401, %v1484
  %1486 = vmatmul.f32.gmra.mxu0 %v1429
  %v1487 = vpop.f32.mrf.mxu0
  %v1488 = vadd.f32 %v1401, %v1487
  %1489 = vmatmul.f32.gmra.mxu0 %v1432
  %v1490 = vpop.f32.mrf.mxu0
  %v1491 = vadd.f32 %v1401, %v1490
  %1492 = vmatmul.f32.gmra.mxu0 %v1435
  %v1493 = vpop.f32.mrf.mxu0
  %v1494 = vadd.f32 %v1401, %v1493
  %1495 = vmatmul.f32.gmra.mxu0 %v1438
  %v1496 = vpop.f32.mrf.mxu0
  %v1497 = vadd.f32 %v1401, %v1496
  %1498 = vmatmul.f32.gmra.mxu0 %v1441
  %v1499 = vpop.f32.mrf.mxu0
  %v1500 = vadd.f32 %v1401, %v1499
  %1501 = vmatmul.f32.gmra.mxu0 %v1444
  %v1502 = vpop.f32.mrf.mxu0
  %v1503 = vadd.f32 %v1401, %v1502
  %1504 = vdwg.mxu0
  %v1505 = vld [vmem:[%s14] sm:$0xff]
  %v1506 = vld [vmem:[%s14 + $0x8] sm:$0xff]
  %v1507 = vld [vmem:[%s14 + $0x10] sm:$0xff]
  %v1508 = vld [vmem:[%s14 + $0x18] sm:$0xff]
  %v1509 = vld [vmem:[%s15] sm:$0x1]
  %v1511 = vperm.slane %v1509, 0
  %v1514 = vsel %vm1403, 0.0, 0
  %1516 = vmatpush.msra.mxu0 0.0
  %1517 = vmatpush.msra.mxu0 0.0
  %1518 = vmatpush.msra.mxu0 0.0
  %1519 = vmatpush.msra.mxu0 0.0
  %1520 = vmatpush.msra.mxu0 0.0
  %1521 = vmatpush.msra.mxu0 0.0
  %1522 = vmatpush.msra.mxu0 0.0
  %1523 = vmatpush.msra.mxu0 0.0
  %1524 = vmatpush.msra.mxu0 0.0
  %1525 = vmatpush.msra.mxu0 0.0
  %1526 = vmatpush.msra.mxu0 0.0
  %1527 = vmatpush.msra.mxu0 0.0
  %1528 = vmatpush.msra.mxu0 %v1508
  %1529 = vmatpush.msra.mxu0 %v1507
  %1530 = vmatpush.msra.mxu0 %v1506
  %1531 = vmatpush.msra.mxu0 %v1505
  %1532 = vmatmul.f32.gmra.mxu0 %v1514
  %v1533 = vpop.f32.mrf.mxu0
  %v1534 = vadd.f32 %v1511, %v1533
  %1535 = vmatmul.f32.gmra.mxu0 %v1514
  %v1536 = vpop.f32.mrf.mxu0
  %v1537 = vadd.f32 %v1511, %v1536
  %1538 = vdwg.mxu0
  %v1539 = vadd.f32 %v1464, %v1534
  %v1540 = vadd.f32 %v1467, %v1537
  %v1541 = vxor.u32 %v1539, 2147483648
  %v1542 = vxor.u32 %v1540, 2147483648
  %v1543 = vmul.f32 %v1541, 1.442695
  %v1544 = vpow.pop %v1543
  %v1545 = vmul.f32 %v1542, 1.442695
  %v1546 = vpow.pop %v1545
  %v1547 = vadd.f32 %v1544, 1.0
  %v1548 = vadd.f32 %v1546, 1.0
  %v1549 = vrcp.pop %v1547
  %v1550 = vmul.f32 %v1547, %v1549
  %v1551 = vsub.f32 1.0, %v1550
  %v1552 = vmul.f32 %v1549, %v1551
  %v1553 = vadd.f32 %v1549, %v1552
  %vm1554 = vweird.f32 %v1547
  %vm1555 = vweird.f32 %v1549
  %vm1556 = vmor %vm1554, %vm1555
  %v1557 = vsel %vm1556, %v1549, %v1553
  %v1558 = vand.u32 2147483647, %v1547
  %vm1559 = vcmp.eq.f32.partialorder %v1558, 8.507059e+37
  %v1560 = vand.u32 %v1547, 2147483648
  %v1561 = vor.u32 1.1754944e-38, %v1560
  %v1562 = vsel %vm1559, %v1561, %v1557
  %v1563 = vmul.f32 1.0, %v1562
  %v1564 = vrcp.pop %v1548
  %v1565 = vmul.f32 %v1548, %v1564
  %v1566 = vsub.f32 1.0, %v1565
  %v1567 = vmul.f32 %v1564, %v1566
  %v1568 = vadd.f32 %v1564, %v1567
  %vm1569 = vweird.f32 %v1548
  %vm1570 = vweird.f32 %v1564
  %vm1571 = vmor %vm1569, %vm1570
  %v1572 = vsel %vm1571, %v1564, %v1568
  %v1573 = vand.u32 2147483647, %v1548
  %vm1574 = vcmp.eq.f32.partialorder %v1573, 8.507059e+37
  %v1575 = vand.u32 %v1548, 2147483648
  %v1576 = vor.u32 1.1754944e-38, %v1575
  %v1577 = vsel %vm1574, %v1576, %v1572
  %v1578 = vmul.f32 1.0, %v1577
  %1581 = vrot.lane.b32.xlu0 %v1534, 64
  %v1582 = vpop.permute.xlu0 %1581
  %1583 = vrot.lane.b32.xlu0 %v1537, 64
  %v1584 = vpop.permute.xlu0 %1583
  %v1587 = vmul.f32 %v1563, %v1582
  %v1588 = vmul.f32 %v1578, %v1584
  %1591 = vrot.lane.b32.xlu0 %v1587, 64
  %v1592 = vpop.permute.xlu0 %1591
  %1593 = vrot.lane.b32.xlu0 %v1588, 64
  %v1594 = vpop.permute.xlu0 %1593
  %v1597 = vadd.f32 %v1464, %v1592
  %v1598 = vadd.f32 %v1467, %v1594
  %v1599 = vtanh.pop %v1597
  %v1600 = vtanh.pop %v1598
  %v1601 = vsub.f32 1.0, %v1563
  %v1602 = vsub.f32 1.0, %v1578
  %1605 = vrot.lane.b32.xlu0 %v1599, 96
  %v1606 = vpop.permute.xlu0 %1605
  %1607 = vrot.lane.b32.xlu0 %v1600, 96
  %v1608 = vpop.permute.xlu0 %1607
  %v1611 = vmul.f32 %v1601, %v1606
  %v1612 = vmul.f32 %v1602, %v1608
  %v1613 = vmul.f32 %v1563, 0.0
  %v1614 = vmul.f32 %v1578, 0.0
  %v1615 = vadd.f32 %v1611, %v1613
  %v1616 = vadd.f32 %v1612, %v1614
  %1619 = vrot.lane.b32.xlu0 %v1615, 96
  %v1620 = vpop.permute.xlu0 %1619
  %1621 = vrot.lane.b32.xlu0 %v1616, 96
  %v1622 = vpop.permute.xlu0 %1621
  %v1623 = vsel %vm1403, %v1620, 0
  %v1625 = vsel %vm1403, %v1622, 0
  %1627 = vmatpush.msra.mxu0 0.0
  %1628 = vmatpush.msra.mxu0 0.0
  %1629 = vmatpush.msra.mxu0 0.0
  %1630 = vmatpush.msra.mxu0 0.0
  %1631 = vmatpush.msra.mxu0 0.0
  %1632 = vmatpush.msra.mxu0 0.0
  %1633 = vmatpush.msra.mxu0 0.0
  %1634 = vmatpush.msra.mxu0 0.0
  %1635 = vmatpush.msra.mxu0 0.0
  %1636 = vmatpush.msra.mxu0 0.0
  %1637 = vmatpush.msra.mxu0 0.0
  %1638 = vmatpush.msra.mxu0 0.0
  %1639 = vmatpush.msra.mxu0 %v1508
  %1640 = vmatpush.msra.mxu0 %v1507
  %1641 = vmatpush.msra.mxu0 %v1506
  %1642 = vmatpush.msra.mxu0 %v1505
  %1643 = vmatmul.f32.gmra.mxu0 %v1623
  %v1644 = vpop.f32.mrf.mxu0
  %v1645 = vadd.f32 %v1511, %v1644
  %1646 = vmatmul.f32.gmra.mxu0 %v1625
  %v1647 = vpop.f32.mrf.mxu0
  %v1648 = vadd.f32 %v1511, %v1647
  %1649 = vdwg.mxu0
  %v1652 = vrot.slane %v1645, 2
  %v1653 = vrot.slane %v1648, 2
  %v1654 = vsel %vm1247, %v1652, %v1653
  %v1658 = vadd.f32 %v1467, %v1652
  %v1659 = vadd.f32 %v1470, %v1654
  %v1660 = vadd.f32 %v1473, %v1653
  %v1661 = vxor.u32 %v1658, 2147483648
  %v1662 = vxor.u32 %v1659, 2147483648
  %v1663 = vxor.u32 %v1660, 2147483648
  %v1664 = vmul.f32 %v1661, 1.442695
  %v1665 = vpow.pop %v1664
  %v1666 = vmul.f32 %v1662, 1.442695
  %v1667 = vpow.pop %v1666
  %v1668 = vmul.f32 %v1663, 1.442695
  %v1669 = vpow.pop %v1668
  %v1670 = vadd.f32 %v1665, 1.0
  %v1671 = vadd.f32 %v1667, 1.0
  %v1672 = vadd.f32 %v1669, 1.0
  %v1673 = vrcp.pop %v1670
  %v1674 = vmul.f32 %v1670, %v1673
  %v1675 = vsub.f32 1.0, %v1674
  %v1676 = vmul.f32 %v1673, %v1675
  %v1677 = vadd.f32 %v1673, %v1676
  %vm1678 = vweird.f32 %v1670
  %vm1679 = vweird.f32 %v1673
  %vm1680 = vmor %vm1678, %vm1679
  %v1681 = vsel %vm1680, %v1673, %v1677
  %v1682 = vand.u32 2147483647, %v1670
  %vm1683 = vcmp.eq.f32.partialorder %v1682, 8.507059e+37
  %v1684 = vand.u32 %v1670, 2147483648
  %v1685 = vor.u32 1.1754944e-38, %v1684
  %v1686 = vsel %vm1683, %v1685, %v1681
  %v1687 = vmul.f32 1.0, %v1686
  %v1688 = vrcp.pop %v1671
  %v1689 = vmul.f32 %v1671, %v1688
  %v1690 = vsub.f32 1.0, %v1689
  %v1691 = vmul.f32 %v1688, %v1690
  %v1692 = vadd.f32 %v1688, %v1691
  %vm1693 = vweird.f32 %v1671
  %vm1694 = vweird.f32 %v1688
  %vm1695 = vmor %vm1693, %vm1694
  %v1696 = vsel %vm1695, %v1688, %v1692
  %v1697 = vand.u32 2147483647, %v1671
  %vm1698 = vcmp.eq.f32.partialorder %v1697, 8.507059e+37
  %v1699 = vand.u32 %v1671, 2147483648
  %v1700 = vor.u32 1.1754944e-38, %v1699
  %v1701 = vsel %vm1698, %v1700, %v1696
  %v1702 = vmul.f32 1.0, %v1701
  %v1703 = vrcp.pop %v1672
  %v1704 = vmul.f32 %v1672, %v1703
  %v1705 = vsub.f32 1.0, %v1704
  %v1706 = vmul.f32 %v1703, %v1705
  %v1707 = vadd.f32 %v1703, %v1706
  %vm1708 = vweird.f32 %v1672
  %vm1709 = vweird.f32 %v1703
  %vm1710 = vmor %vm1708, %vm1709
  %v1711 = vsel %vm1710, %v1703, %v1707
  %v1712 = vand.u32 2147483647, %v1672
  %vm1713 = vcmp.eq.f32.partialorder %v1712, 8.507059e+37
  %v1714 = vand.u32 %v1672, 2147483648
  %v1715 = vor.u32 1.1754944e-38, %v1714
  %v1716 = vsel %vm1713, %v1715, %v1711
  %v1717 = vmul.f32 1.0, %v1716
  %1718 = vrot.lane.b32.xlu0 %v1652, 64
  %v1719 = vpop.permute.xlu0 %1718
  %1720 = vrot.lane.b32.xlu0 %v1654, 64
  %v1721 = vpop.permute.xlu0 %1720
  %1722 = vrot.lane.b32.xlu0 %v1653, 64
  %v1723 = vpop.permute.xlu0 %1722
  %v1727 = vmul.f32 %v1687, %v1719
  %v1728 = vmul.f32 %v1702, %v1721
  %v1729 = vmul.f32 %v1717, %v1723
  %1733 = vrot.lane.b32.xlu0 %v1727, 64
  %v1734 = vpop.permute.xlu0 %1733
  %1735 = vrot.lane.b32.xlu0 %v1728, 64
  %v1736 = vpop.permute.xlu0 %1735
  %1737 = vrot.lane.b32.xlu0 %v1729, 64
  %v1738 = vpop.permute.xlu0 %1737
  %v1742 = vadd.f32 %v1467, %v1734
  %v1743 = vadd.f32 %v1470, %v1736
  %v1744 = vadd.f32 %v1473, %v1738
  %v1745 = vtanh.pop %v1742
  %v1746 = vtanh.pop %v1743
  %v1747 = vtanh.pop %v1744
  %v1748 = vsub.f32 1.0, %v1687
  %v1749 = vsub.f32 1.0, %v1702
  %v1750 = vsub.f32 1.0, %v1717
  %1754 = vrot.lane.b32.xlu0 %v1745, 96
  %v1755 = vpop.permute.xlu0 %1754
  %1756 = vrot.lane.b32.xlu0 %v1746, 96
  %v1757 = vpop.permute.xlu0 %1756
  %1758 = vrot.lane.b32.xlu0 %v1747, 96
  %v1759 = vpop.permute.xlu0 %1758
  %v1763 = vmul.f32 %v1748, %v1755
  %v1764 = vmul.f32 %v1749, %v1757
  %v1765 = vmul.f32 %v1750, %v1759
  %v1766 = vrot.slane %v1615, 2
  %v1767 = vrot.slane %v1616, 2
  %v1768 = vsel %vm1247, %v1766, %v1767
  %v1772 = vmul.f32 %v1687, %v1766
  %v1773 = vmul.f32 %v1702, %v1768
  %v1774 = vmul.f32 %v1717, %v1767
  %v1775 = vadd.f32 %v1763, %v1772
  %v1776 = vadd.f32 %v1764, %v1773
  %v1777 = vadd.f32 %v1765, %v1774
  %vm1781 = vcmask 1041408
  %v1782 = vrot.slane %v1775, 6
  %v1783 = vrot.slane %v1776, 6
  %v1784 = vsel %vm1781, %v1782, %v1783
  %v1785 = vrot.slane %v1777, 6
  %v1786 = vsel %vm1781, %v1783, %v1785
  %1787 = vrot.lane.b32.xlu0 %v1784, 96
  %v1788 = vpop.permute.xlu0 %1787
  %1789 = vrot.lane.b32.xlu0 %v1786, 96
  %v1790 = vpop.permute.xlu0 %1789
  %v1791 = vsel %vm1403, %v1788, 0
  %v1793 = vsel %vm1403, %v1790, 0
  %1795 = vmatpush.msra.mxu0 0.0
  %1796 = vmatpush.msra.mxu0 0.0
  %1797 = vmatpush.msra.mxu0 0.0
  %1798 = vmatpush.msra.mxu0 0.0
  %1799 = vmatpush.msra.mxu0 0.0
  %1800 = vmatpush.msra.mxu0 0.0
  %1801 = vmatpush.msra.mxu0 0.0
  %1802 = vmatpush.msra.mxu0 0.0
  %1803 = vmatpush.msra.mxu0 0.0
  %1804 = vmatpush.msra.mxu0 0.0
  %1805 = vmatpush.msra.mxu0 0.0
  %1806 = vmatpush.msra.mxu0 0.0
  %1807 = vmatpush.msra.mxu0 %v1508
  %1808 = vmatpush.msra.mxu0 %v1507
  %1809 = vmatpush.msra.mxu0 %v1506
  %1810 = vmatpush.msra.mxu0 %v1505
  %1811 = vmatmul.f32.gmra.mxu0 %v1791
  %v1812 = vpop.f32.mrf.mxu0
  %v1813 = vadd.f32 %v1511, %v1812
  %1814 = vmatmul.f32.gmra.mxu0 %v1793
  %v1815 = vpop.f32.mrf.mxu0
  %v1816 = vadd.f32 %v1511, %v1815
  %1817 = vdwg.mxu0
  %v1820 = vrot.slane %v1813, 4
  %v1821 = vrot.slane %v1816, 4
  %v1822 = vsel %vm129, %v1820, %v1821
  %v1826 = vadd.f32 %v1473, %v1820
  %v1827 = vadd.f32 %v1476, %v1822
  %v1828 = vadd.f32 %v1479, %v1821
  %v1829 = vxor.u32 %v1826, 2147483648
  %v1830 = vxor.u32 %v1827, 2147483648
  %v1831 = vxor.u32 %v1828, 2147483648
  %v1832 = vmul.f32 %v1829, 1.442695
  %v1833 = vpow.pop %v1832
  %v1834 = vmul.f32 %v1830, 1.442695
  %v1835 = vpow.pop %v1834
  %v1836 = vmul.f32 %v1831, 1.442695
  %v1837 = vpow.pop %v1836
  %v1838 = vadd.f32 %v1833, 1.0
  %v1839 = vadd.f32 %v1835, 1.0
  %v1840 = vadd.f32 %v1837, 1.0
  %v1841 = vrcp.pop %v1838
  %v1842 = vmul.f32 %v1838, %v1841
  %v1843 = vsub.f32 1.0, %v1842
  %v1844 = vmul.f32 %v1841, %v1843
  %v1845 = vadd.f32 %v1841, %v1844
  %vm1846 = vweird.f32 %v1838
  %vm1847 = vweird.f32 %v1841
  %vm1848 = vmor %vm1846, %vm1847
  %v1849 = vsel %vm1848, %v1841, %v1845
  %v1850 = vand.u32 2147483647, %v1838
  %vm1851 = vcmp.eq.f32.partialorder %v1850, 8.507059e+37
  %v1852 = vand.u32 %v1838, 2147483648
  %v1853 = vor.u32 1.1754944e-38, %v1852
  %v1854 = vsel %vm1851, %v1853, %v1849
  %v1855 = vmul.f32 1.0, %v1854
  %v1856 = vrcp.pop %v1839
  %v1857 = vmul.f32 %v1839, %v1856
  %v1858 = vsub.f32 1.0, %v1857
  %v1859 = vmul.f32 %v1856, %v1858
  %v1860 = vadd.f32 %v1856, %v1859
  %vm1861 = vweird.f32 %v1839
  %vm1862 = vweird.f32 %v1856
  %vm1863 = vmor %vm1861, %vm1862
  %v1864 = vsel %vm1863, %v1856, %v1860
  %v1865 = vand.u32 2147483647, %v1839
  %vm1866 = vcmp.eq.f32.partialorder %v1865, 8.507059e+37
  %v1867 = vand.u32 %v1839, 2147483648
  %v1868 = vor.u32 1.1754944e-38, %v1867
  %v1869 = vsel %vm1866, %v1868, %v1864
  %v1870 = vmul.f32 1.0, %v1869
  %v1871 = vrcp.pop %v1840
  %v1872 = vmul.f32 %v1840, %v1871
  %v1873 = vsub.f32 1.0, %v1872
  %v1874 = vmul.f32 %v1871, %v1873
  %v1875 = vadd.f32 %v1871, %v1874
  %vm1876 = vweird.f32 %v1840
  %vm1877 = vweird.f32 %v1871
  %vm1878 = vmor %vm1876, %vm1877
  %v1879 = vsel %vm1878, %v1871, %v1875
  %v1880 = vand.u32 2147483647, %v1840
  %vm1881 = vcmp.eq.f32.partialorder %v1880, 8.507059e+37
  %v1882 = vand.u32 %v1840, 2147483648
  %v1883 = vor.u32 1.1754944e-38, %v1882
  %v1884 = vsel %vm1881, %v1883, %v1879
  %v1885 = vmul.f32 1.0, %v1884
  %1886 = vrot.lane.b32.xlu0 %v1820, 64
  %v1887 = vpop.permute.xlu0 %1886
  %1888 = vrot.lane.b32.xlu0 %v1822, 64
  %v1889 = vpop.permute.xlu0 %1888
  %1890 = vrot.lane.b32.xlu0 %v1821, 64
  %v1891 = vpop.permute.xlu0 %1890
  %v1895 = vmul.f32 %v1855, %v1887
  %v1896 = vmul.f32 %v1870, %v1889
  %v1897 = vmul.f32 %v1885, %v1891
  %1901 = vrot.lane.b32.xlu0 %v1895, 64
  %v1902 = vpop.permute.xlu0 %1901
  %1903 = vrot.lane.b32.xlu0 %v1896, 64
  %v1904 = vpop.permute.xlu0 %1903
  %1905 = vrot.lane.b32.xlu0 %v1897, 64
  %v1906 = vpop.permute.xlu0 %1905
  %v1910 = vadd.f32 %v1473, %v1902
  %v1911 = vadd.f32 %v1476, %v1904
  %v1912 = vadd.f32 %v1479, %v1906
  %v1913 = vtanh.pop %v1910
  %v1914 = vtanh.pop %v1911
  %v1915 = vtanh.pop %v1912
  %v1916 = vsub.f32 1.0, %v1855
  %v1917 = vsub.f32 1.0, %v1870
  %v1918 = vsub.f32 1.0, %v1885
  %1922 = vrot.lane.b32.xlu0 %v1913, 96
  %v1923 = vpop.permute.xlu0 %1922
  %1924 = vrot.lane.b32.xlu0 %v1914, 96
  %v1925 = vpop.permute.xlu0 %1924
  %1926 = vrot.lane.b32.xlu0 %v1915, 96
  %v1927 = vpop.permute.xlu0 %1926
  %v1931 = vmul.f32 %v1916, %v1923
  %v1932 = vmul.f32 %v1917, %v1925
  %v1933 = vmul.f32 %v1918, %v1927
  %v1934 = vrot.slane %v1775, 2
  %v1935 = vrot.slane %v1776, 2
  %v1936 = vsel %vm1247, %v1934, %v1935
  %v1937 = vrot.slane %v1777, 2
  %v1938 = vsel %vm1247, %v1935, %v1937
  %v1942 = vmul.f32 %v1855, %v1936
  %v1943 = vmul.f32 %v1870, %v1938
  %v1944 = vmul.f32 %v1885, %v1937
  %v1945 = vadd.f32 %v1931, %v1942
  %v1946 = vadd.f32 %v1932, %v1943
  %v1947 = vadd.f32 %v1933, %v1944
  %v1951 = vrot.slane %v1945, 4
  %v1952 = vrot.slane %v1946, 4
  %v1953 = vsel %vm129, %v1951, %v1952
  %v1954 = vrot.slane %v1947, 4
  %v1955 = vsel %vm129, %v1952, %v1954
  %1956 = vrot.lane.b32.xlu0 %v1953, 96
  %v1957 = vpop.permute.xlu0 %1956
  %1958 = vrot.lane.b32.xlu0 %v1955, 96
  %v1959 = vpop.permute.xlu0 %1958
  %v1960 = vsel %vm1403, %v1957, 0
  %v1962 = vsel %vm1403, %v1959, 0
  %1964 = vmatpush.msra.mxu0 0.0
  %1965 = vmatpush.msra.mxu0 0.0
  %1966 = vmatpush.msra.mxu0 0.0
  %1967 = vmatpush.msra.mxu0 0.0
  %1968 = vmatpush.msra.mxu0 0.0
  %1969 = vmatpush.msra.mxu0 0.0
  %1970 = vmatpush.msra.mxu0 0.0
  %1971 = vmatpush.msra.mxu0 0.0
  %1972 = vmatpush.msra.mxu0 0.0
  %1973 = vmatpush.msra.mxu0 0.0
  %1974 = vmatpush.msra.mxu0 0.0
  %1975 = vmatpush.msra.mxu0 0.0
  %1976 = vmatpush.msra.mxu0 %v1508
  %1977 = vmatpush.msra.mxu0 %v1507
  %1978 = vmatpush.msra.mxu0 %v1506
  %1979 = vmatpush.msra.mxu0 %v1505
  %1980 = vmatmul.f32.gmra.mxu0 %v1960
  %v1981 = vpop.f32.mrf.mxu0
  %v1982 = vadd.f32 %v1511, %v1981
  %1983 = vmatmul.f32.gmra.mxu0 %v1962
  %v1984 = vpop.f32.mrf.mxu0
  %v1985 = vadd.f32 %v1511, %v1984
  %1986 = vdwg.mxu0
  %v1989 = vrot.slane %v1982, 6
  %v1990 = vrot.slane %v1985, 6
  %v1991 = vsel %vm1781, %v1989, %v1990
  %v1994 = vadd.f32 %v1479, %v1989
  %v1995 = vadd.f32 %v1482, %v1991
  %v1996 = vxor.u32 %v1994, 2147483648
  %v1997 = vxor.u32 %v1995, 2147483648
  %v1998 = vmul.f32 %v1996, 1.442695
  %v1999 = vpow.pop %v1998
  %v2000 = vmul.f32 %v1997, 1.442695
  %v2001 = vpow.pop %v2000
  %v2002 = vadd.f32 %v1999, 1.0
  %v2003 = vadd.f32 %v2001, 1.0
  %v2004 = vrcp.pop %v2002
  %v2005 = vmul.f32 %v2002, %v2004
  %v2006 = vsub.f32 1.0, %v2005
  %v2007 = vmul.f32 %v2004, %v2006
  %v2008 = vadd.f32 %v2004, %v2007
  %vm2009 = vweird.f32 %v2002
  %vm2010 = vweird.f32 %v2004
  %vm2011 = vmor %vm2009, %vm2010
  %v2012 = vsel %vm2011, %v2004, %v2008
  %v2013 = vand.u32 2147483647, %v2002
  %vm2014 = vcmp.eq.f32.partialorder %v2013, 8.507059e+37
  %v2015 = vand.u32 %v2002, 2147483648
  %v2016 = vor.u32 1.1754944e-38, %v2015
  %v2017 = vsel %vm2014, %v2016, %v2012
  %v2018 = vmul.f32 1.0, %v2017
  %v2019 = vrcp.pop %v2003
  %v2020 = vmul.f32 %v2003, %v2019
  %v2021 = vsub.f32 1.0, %v2020
  %v2022 = vmul.f32 %v2019, %v2021
  %v2023 = vadd.f32 %v2019, %v2022
  %vm2024 = vweird.f32 %v2003
  %vm2025 = vweird.f32 %v2019
  %vm2026 = vmor %vm2024, %vm2025
  %v2027 = vsel %vm2026, %v2019, %v2023
  %v2028 = vand.u32 2147483647, %v2003
  %vm2029 = vcmp.eq.f32.partialorder %v2028, 8.507059e+37
  %v2030 = vand.u32 %v2003, 2147483648
  %v2031 = vor.u32 1.1754944e-38, %v2030
  %v2032 = vsel %vm2029, %v2031, %v2027
  %v2033 = vmul.f32 1.0, %v2032
  %2034 = vrot.lane.b32.xlu0 %v1989, 64
  %v2035 = vpop.permute.xlu0 %2034
  %2036 = vrot.lane.b32.xlu0 %v1991, 64
  %v2037 = vpop.permute.xlu0 %2036
  %v2040 = vmul.f32 %v2018, %v2035
  %v2041 = vmul.f32 %v2033, %v2037
  %2044 = vrot.lane.b32.xlu0 %v2040, 64
  %v2045 = vpop.permute.xlu0 %2044
  %2046 = vrot.lane.b32.xlu0 %v2041, 64
  %v2047 = vpop.permute.xlu0 %2046
  %v2050 = vadd.f32 %v1479, %v2045
  %v2051 = vadd.f32 %v1482, %v2047
  %v2052 = vtanh.pop %v2050
  %v2053 = vtanh.pop %v2051
  %v2054 = vsub.f32 1.0, %v2018
  %v2055 = vsub.f32 1.0, %v2033
  %2058 = vrot.lane.b32.xlu0 %v2052, 96
  %v2059 = vpop.permute.xlu0 %2058
  %2060 = vrot.lane.b32.xlu0 %v2053, 96
  %v2061 = vpop.permute.xlu0 %2060
  %v2064 = vmul.f32 %v2054, %v2059
  %v2065 = vmul.f32 %v2055, %v2061
  %v2066 = vrot.slane %v1945, 2
  %v2067 = vrot.slane %v1946, 2
  %v2068 = vsel %vm1247, %v2066, %v2067
  %v2069 = vrot.slane %v1947, 2
  %v2070 = vsel %vm1247, %v2067, %v2069
  %v2073 = vmul.f32 %v2018, %v2068
  %v2074 = vmul.f32 %v2033, %v2070
  %v2075 = vadd.f32 %v2064, %v2073
  %v2076 = vadd.f32 %v2065, %v2074
  %v2079 = vrot.slane %v2075, 2
  %v2080 = vrot.slane %v2076, 2
  %v2081 = vsel %vm1247, %v2079, %v2080
  %2082 = vrot.lane.b32.xlu0 %v2081, 96
  %v2083 = vpop.permute.xlu0 %2082
  %2084 = vrot.lane.b32.xlu0 %v2080, 96
  %v2085 = vpop.permute.xlu0 %2084
  %v2086 = vsel %vm1403, %v2083, 0
  %v2088 = vsel %vm1403, %v2085, 0
  %2090 = vmatpush.msra.mxu0 0.0
  %2091 = vmatpush.msra.mxu0 0.0
  %2092 = vmatpush.msra.mxu0 0.0
  %2093 = vmatpush.msra.mxu0 0.0
  %2094 = vmatpush.msra.mxu0 0.0
  %2095 = vmatpush.msra.mxu0 0.0
  %2096 = vmatpush.msra.mxu0 0.0
  %2097 = vmatpush.msra.mxu0 0.0
  %2098 = vmatpush.msra.mxu0 0.0
  %2099 = vmatpush.msra.mxu0 0.0
  %2100 = vmatpush.msra.mxu0 0.0
  %2101 = vmatpush.msra.mxu0 0.0
  %2102 = vmatpush.msra.mxu0 %v1508
  %2103 = vmatpush.msra.mxu0 %v1507
  %2104 = vmatpush.msra.mxu0 %v1506
  %2105 = vmatpush.msra.mxu0 %v1505
  %2106 = vmatmul.f32.gmra.mxu0 %v2086
  %v2107 = vpop.f32.mrf.mxu0
  %v2108 = vadd.f32 %v1511, %v2107
  %2109 = vmatmul.f32.gmra.mxu0 %v2088
  %v2110 = vpop.f32.mrf.mxu0
  %v2111 = vadd.f32 %v1511, %v2110
  %2112 = vdwg.mxu0
  %v2113 = vadd.f32 %v1485, %v2108
  %v2114 = vadd.f32 %v1488, %v2111
  %v2115 = vxor.u32 %v2113, 2147483648
  %v2116 = vxor.u32 %v2114, 2147483648
  %v2117 = vmul.f32 %v2115, 1.442695
  %v2118 = vpow.pop %v2117
  %v2119 = vmul.f32 %v2116, 1.442695
  %v2120 = vpow.pop %v2119
  %v2121 = vadd.f32 %v2118, 1.0
  %v2122 = vadd.f32 %v2120, 1.0
  %v2123 = vrcp.pop %v2121
  %v2124 = vmul.f32 %v2121, %v2123
  %v2125 = vsub.f32 1.0, %v2124
  %v2126 = vmul.f32 %v2123, %v2125
  %v2127 = vadd.f32 %v2123, %v2126
  %vm2128 = vweird.f32 %v2121
  %vm2129 = vweird.f32 %v2123
  %vm2130 = vmor %vm2128, %vm2129
  %v2131 = vsel %vm2130, %v2123, %v2127
  %v2132 = vand.u32 2147483647, %v2121
  %vm2133 = vcmp.eq.f32.partialorder %v2132, 8.507059e+37
  %v2134 = vand.u32 %v2121, 2147483648
  %v2135 = vor.u32 1.1754944e-38, %v2134
  %v2136 = vsel %vm2133, %v2135, %v2131
  %v2137 = vmul.f32 1.0, %v2136
  %v2138 = vrcp.pop %v2122
  %v2139 = vmul.f32 %v2122, %v2138
  %v2140 = vsub.f32 1.0, %v2139
  %v2141 = vmul.f32 %v2138, %v2140
  %v2142 = vadd.f32 %v2138, %v2141
  %vm2143 = vweird.f32 %v2122
  %vm2144 = vweird.f32 %v2138
  %vm2145 = vmor %vm2143, %vm2144
  %v2146 = vsel %vm2145, %v2138, %v2142
  %v2147 = vand.u32 2147483647, %v2122
  %vm2148 = vcmp.eq.f32.partialorder %v2147, 8.507059e+37
  %v2149 = vand.u32 %v2122, 2147483648
  %v2150 = vor.u32 1.1754944e-38, %v2149
  %v2151 = vsel %vm2148, %v2150, %v2146
  %v2152 = vmul.f32 1.0, %v2151
  %2155 = vrot.lane.b32.xlu0 %v2108, 64
  %v2156 = vpop.permute.xlu0 %2155
  %2157 = vrot.lane.b32.xlu0 %v2111, 64
  %v2158 = vpop.permute.xlu0 %2157
  %v2161 = vmul.f32 %v2137, %v2156
  %v2162 = vmul.f32 %v2152, %v2158
  %2165 = vrot.lane.b32.xlu0 %v2161, 64
  %v2166 = vpop.permute.xlu0 %2165
  %2167 = vrot.lane.b32.xlu0 %v2162, 64
  %v2168 = vpop.permute.xlu0 %2167
  %v2171 = vadd.f32 %v1485, %v2166
  %v2172 = vadd.f32 %v1488, %v2168
  %v2173 = vtanh.pop %v2171
  %v2174 = vtanh.pop %v2172
  %v2175 = vsub.f32 1.0, %v2137
  %v2176 = vsub.f32 1.0, %v2152
  %2179 = vrot.lane.b32.xlu0 %v2173, 96
  %v2180 = vpop.permute.xlu0 %2179
  %2181 = vrot.lane.b32.xlu0 %v2174, 96
  %v2182 = vpop.permute.xlu0 %2181
  %v2185 = vmul.f32 %v2175, %v2180
  %v2186 = vmul.f32 %v2176, %v2182
  %v2189 = vmul.f32 %v2137, %v2081
  %v2190 = vmul.f32 %v2152, %v2080
  %v2191 = vadd.f32 %v2185, %v2189
  %v2192 = vadd.f32 %v2186, %v2190
  %2195 = vrot.lane.b32.xlu0 %v2191, 96
  %v2196 = vpop.permute.xlu0 %2195
  %2197 = vrot.lane.b32.xlu0 %v2192, 96
  %v2198 = vpop.permute.xlu0 %2197
  %v2199 = vsel %vm1403, %v2196, 0
  %v2201 = vsel %vm1403, %v2198, 0
  %2203 = vmatpush.msra.mxu0 0.0
  %2204 = vmatpush.msra.mxu0 0.0
  %2205 = vmatpush.msra.mxu0 0.0
  %2206 = vmatpush.msra.mxu0 0.0
  %2207 = vmatpush.msra.mxu0 0.0
  %2208 = vmatpush.msra.mxu0 0.0
  %2209 = vmatpush.msra.mxu0 0.0
  %2210 = vmatpush.msra.mxu0 0.0
  %2211 = vmatpush.msra.mxu0 0.0
  %2212 = vmatpush.msra.mxu0 0.0
  %2213 = vmatpush.msra.mxu0 0.0
  %2214 = vmatpush.msra.mxu0 0.0
  %2215 = vmatpush.msra.mxu0 %v1508
  %2216 = vmatpush.msra.mxu0 %v1507
  %2217 = vmatpush.msra.mxu0 %v1506
  %2218 = vmatpush.msra.mxu0 %v1505
  %2219 = vmatmul.f32.gmra.mxu0 %v2199
  %v2220 = vpop.f32.mrf.mxu0
  %v2221 = vadd.f32 %v1511, %v2220
  %2222 = vmatmul.f32.gmra.mxu0 %v2201
  %v2223 = vpop.f32.mrf.mxu0
  %v2224 = vadd.f32 %v1511, %v2223
  %2225 = vdwg.mxu0
  %v2228 = vrot.slane %v2221, 2
  %v2229 = vrot.slane %v2224, 2
  %v2230 = vsel %vm1247, %v2228, %v2229
  %v2234 = vadd.f32 %v1488, %v2228
  %v2235 = vadd.f32 %v1491, %v2230
  %v2236 = vadd.f32 %v1494, %v2229
  %v2237 = vxor.u32 %v2234, 2147483648
  %v2238 = vxor.u32 %v2235, 2147483648
  %v2239 = vxor.u32 %v2236, 2147483648
  %v2240 = vmul.f32 %v2237, 1.442695
  %v2241 = vpow.pop %v2240
  %v2242 = vmul.f32 %v2238, 1.442695
  %v2243 = vpow.pop %v2242
  %v2244 = vmul.f32 %v2239, 1.442695
  %v2245 = vpow.pop %v2244
  %v2246 = vadd.f32 %v2241, 1.0
  %v2247 = vadd.f32 %v2243, 1.0
  %v2248 = vadd.f32 %v2245, 1.0
  %v2249 = vrcp.pop %v2246
  %v2250 = vmul.f32 %v2246, %v2249
  %v2251 = vsub.f32 1.0, %v2250
  %v2252 = vmul.f32 %v2249, %v2251
  %v2253 = vadd.f32 %v2249, %v2252
  %vm2254 = vweird.f32 %v2246
  %vm2255 = vweird.f32 %v2249
  %vm2256 = vmor %vm2254, %vm2255
  %v2257 = vsel %vm2256, %v2249, %v2253
  %v2258 = vand.u32 2147483647, %v2246
  %vm2259 = vcmp.eq.f32.partialorder %v2258, 8.507059e+37
  %v2260 = vand.u32 %v2246, 2147483648
  %v2261 = vor.u32 1.1754944e-38, %v2260
  %v2262 = vsel %vm2259, %v2261, %v2257
  %v2263 = vmul.f32 1.0, %v2262
  %v2264 = vrcp.pop %v2247
  %v2265 = vmul.f32 %v2247, %v2264
  %v2266 = vsub.f32 1.0, %v2265
  %v2267 = vmul.f32 %v2264, %v2266
  %v2268 = vadd.f32 %v2264, %v2267
  %vm2269 = vweird.f32 %v2247
  %vm2270 = vweird.f32 %v2264
  %vm2271 = vmor %vm2269, %vm2270
  %v2272 = vsel %vm2271, %v2264, %v2268
  %v2273 = vand.u32 2147483647, %v2247
  %vm2274 = vcmp.eq.f32.partialorder %v2273, 8.507059e+37
  %v2275 = vand.u32 %v2247, 2147483648
  %v2276 = vor.u32 1.1754944e-38, %v2275
  %v2277 = vsel %vm2274, %v2276, %v2272
  %v2278 = vmul.f32 1.0, %v2277
  %v2279 = vrcp.pop %v2248
  %v2280 = vmul.f32 %v2248, %v2279
  %v2281 = vsub.f32 1.0, %v2280
  %v2282 = vmul.f32 %v2279, %v2281
  %v2283 = vadd.f32 %v2279, %v2282
  %vm2284 = vweird.f32 %v2248
  %vm2285 = vweird.f32 %v2279
  %vm2286 = vmor %vm2284, %vm2285
  %v2287 = vsel %vm2286, %v2279, %v2283
  %v2288 = vand.u32 2147483647, %v2248
  %vm2289 = vcmp.eq.f32.partialorder %v2288, 8.507059e+37
  %v2290 = vand.u32 %v2248, 2147483648
  %v2291 = vor.u32 1.1754944e-38, %v2290
  %v2292 = vsel %vm2289, %v2291, %v2287
  %v2293 = vmul.f32 1.0, %v2292
  %2294 = vrot.lane.b32.xlu0 %v2228, 64
  %v2295 = vpop.permute.xlu0 %2294
  %2296 = vrot.lane.b32.xlu0 %v2230, 64
  %v2297 = vpop.permute.xlu0 %2296
  %2298 = vrot.lane.b32.xlu0 %v2229, 64
  %v2299 = vpop.permute.xlu0 %2298
  %v2303 = vmul.f32 %v2263, %v2295
  %v2304 = vmul.f32 %v2278, %v2297
  %v2305 = vmul.f32 %v2293, %v2299
  %2309 = vrot.lane.b32.xlu0 %v2303, 64
  %v2310 = vpop.permute.xlu0 %2309
  %2311 = vrot.lane.b32.xlu0 %v2304, 64
  %v2312 = vpop.permute.xlu0 %2311
  %2313 = vrot.lane.b32.xlu0 %v2305, 64
  %v2314 = vpop.permute.xlu0 %2313
  %v2318 = vadd.f32 %v1488, %v2310
  %v2319 = vadd.f32 %v1491, %v2312
  %v2320 = vadd.f32 %v1494, %v2314
  %v2321 = vtanh.pop %v2318
  %v2322 = vtanh.pop %v2319
  %v2323 = vtanh.pop %v2320
  %v2324 = vsub.f32 1.0, %v2263
  %v2325 = vsub.f32 1.0, %v2278
  %v2326 = vsub.f32 1.0, %v2293
  %2330 = vrot.lane.b32.xlu0 %v2321, 96
  %v2331 = vpop.permute.xlu0 %2330
  %2332 = vrot.lane.b32.xlu0 %v2322, 96
  %v2333 = vpop.permute.xlu0 %2332
  %2334 = vrot.lane.b32.xlu0 %v2323, 96
  %v2335 = vpop.permute.xlu0 %2334
  %v2339 = vmul.f32 %v2324, %v2331
  %v2340 = vmul.f32 %v2325, %v2333
  %v2341 = vmul.f32 %v2326, %v2335
  %v2342 = vrot.slane %v2191, 2
  %v2343 = vrot.slane %v2192, 2
  %v2344 = vsel %vm1247, %v2342, %v2343
  %v2348 = vmul.f32 %v2263, %v2342
  %v2349 = vmul.f32 %v2278, %v2344
  %v2350 = vmul.f32 %v2293, %v2343
  %v2351 = vadd.f32 %v2339, %v2348
  %v2352 = vadd.f32 %v2340, %v2349
  %v2353 = vadd.f32 %v2341, %v2350
  %v2357 = vrot.slane %v2351, 6
  %v2358 = vrot.slane %v2352, 6
  %v2359 = vsel %vm1781, %v2357, %v2358
  %v2360 = vrot.slane %v2353, 6
  %v2361 = vsel %vm1781, %v2358, %v2360
  %2362 = vrot.lane.b32.xlu0 %v2359, 96
  %v2363 = vpop.permute.xlu0 %2362
  %2364 = vrot.lane.b32.xlu0 %v2361, 96
  %v2365 = vpop.permute.xlu0 %2364
  %v2366 = vsel %vm1403, %v2363, 0
  %v2368 = vsel %vm1403, %v2365, 0
  %2370 = vmatpush.msra.mxu0 0.0
  %2371 = vmatpush.msra.mxu0 0.0
  %2372 = vmatpush.msra.mxu0 0.0
  %2373 = vmatpush.msra.mxu0 0.0
  %2374 = vmatpush.msra.mxu0 0.0
  %2375 = vmatpush.msra.mxu0 0.0
  %2376 = vmatpush.msra.mxu0 0.0
  %2377 = vmatpush.msra.mxu0 0.0
  %2378 = vmatpush.msra.mxu0 0.0
  %2379 = vmatpush.msra.mxu0 0.0
  %2380 = vmatpush.msra.mxu0 0.0
  %2381 = vmatpush.msra.mxu0 0.0
  %2382 = vmatpush.msra.mxu0 %v1508
  %2383 = vmatpush.msra.mxu0 %v1507
  %2384 = vmatpush.msra.mxu0 %v1506
  %2385 = vmatpush.msra.mxu0 %v1505
  %2386 = vmatmul.f32.gmra.mxu0 %v2366
  %v2387 = vpop.f32.mrf.mxu0
  %v2388 = vadd.f32 %v1511, %v2387
  %2389 = vmatmul.f32.gmra.mxu0 %v2368
  %v2390 = vpop.f32.mrf.mxu0
  %v2391 = vadd.f32 %v1511, %v2390
  %2392 = vdwg.mxu0
  %v2395 = vrot.slane %v2388, 4
  %v2396 = vrot.slane %v2391, 4
  %v2397 = vsel %vm129, %v2395, %v2396
  %v2401 = vadd.f32 %v1494, %v2395
  %v2402 = vadd.f32 %v1497, %v2397
  %v2403 = vadd.f32 %v1500, %v2396
  %v2404 = vxor.u32 %v2401, 2147483648
  %v2405 = vxor.u32 %v2402, 2147483648
  %v2406 = vxor.u32 %v2403, 2147483648
  %v2407 = vmul.f32 %v2404, 1.442695
  %v2408 = vpow.pop %v2407
  %v2409 = vmul.f32 %v2405, 1.442695
  %v2410 = vpow.pop %v2409
  %v2411 = vmul.f32 %v2406, 1.442695
  %v2412 = vpow.pop %v2411
  %v2413 = vadd.f32 %v2408, 1.0
  %v2414 = vadd.f32 %v2410, 1.0
  %v2415 = vadd.f32 %v2412, 1.0
  %v2416 = vrcp.pop %v2413
  %v2417 = vmul.f32 %v2413, %v2416
  %v2418 = vsub.f32 1.0, %v2417
  %v2419 = vmul.f32 %v2416, %v2418
  %v2420 = vadd.f32 %v2416, %v2419
  %vm2421 = vweird.f32 %v2413
  %vm2422 = vweird.f32 %v2416
  %vm2423 = vmor %vm2421, %vm2422
  %v2424 = vsel %vm2423, %v2416, %v2420
  %v2425 = vand.u32 2147483647, %v2413
  %vm2426 = vcmp.eq.f32.partialorder %v2425, 8.507059e+37
  %v2427 = vand.u32 %v2413, 2147483648
  %v2428 = vor.u32 1.1754944e-38, %v2427
  %v2429 = vsel %vm2426, %v2428, %v2424
  %v2430 = vmul.f32 1.0, %v2429
  %v2431 = vrcp.pop %v2414
  %v2432 = vmul.f32 %v2414, %v2431
  %v2433 = vsub.f32 1.0, %v2432
  %v2434 = vmul.f32 %v2431, %v2433
  %v2435 = vadd.f32 %v2431, %v2434
  %vm2436 = vweird.f32 %v2414
  %vm2437 = vweird.f32 %v2431
  %vm2438 = vmor %vm2436, %vm2437
  %v2439 = vsel %vm2438, %v2431, %v2435
  %v2440 = vand.u32 2147483647, %v2414
  %vm2441 = vcmp.eq.f32.partialorder %v2440, 8.507059e+37
  %v2442 = vand.u32 %v2414, 2147483648
  %v2443 = vor.u32 1.1754944e-38, %v2442
  %v2444 = vsel %vm2441, %v2443, %v2439
  %v2445 = vmul.f32 1.0, %v2444
  %v2446 = vrcp.pop %v2415
  %v2447 = vmul.f32 %v2415, %v2446
  %v2448 = vsub.f32 1.0, %v2447
  %v2449 = vmul.f32 %v2446, %v2448
  %v2450 = vadd.f32 %v2446, %v2449
  %vm2451 = vweird.f32 %v2415
  %vm2452 = vweird.f32 %v2446
  %vm2453 = vmor %vm2451, %vm2452
  %v2454 = vsel %vm2453, %v2446, %v2450
  %v2455 = vand.u32 2147483647, %v2415
  %vm2456 = vcmp.eq.f32.partialorder %v2455, 8.507059e+37
  %v2457 = vand.u32 %v2415, 2147483648
  %v2458 = vor.u32 1.1754944e-38, %v2457
  %v2459 = vsel %vm2456, %v2458, %v2454
  %v2460 = vmul.f32 1.0, %v2459
  %2461 = vrot.lane.b32.xlu0 %v2395, 64
  %v2462 = vpop.permute.xlu0 %2461
  %2463 = vrot.lane.b32.xlu0 %v2397, 64
  %v2464 = vpop.permute.xlu0 %2463
  %2465 = vrot.lane.b32.xlu0 %v2396, 64
  %v2466 = vpop.permute.xlu0 %2465
  %v2470 = vmul.f32 %v2430, %v2462
  %v2471 = vmul.f32 %v2445, %v2464
  %v2472 = vmul.f32 %v2460, %v2466
  %2476 = vrot.lane.b32.xlu0 %v2470, 64
  %v2477 = vpop.permute.xlu0 %2476
  %2478 = vrot.lane.b32.xlu0 %v2471, 64
  %v2479 = vpop.permute.xlu0 %2478
  %2480 = vrot.lane.b32.xlu0 %v2472, 64
  %v2481 = vpop.permute.xlu0 %2480
  %v2485 = vadd.f32 %v1494, %v2477
  %v2486 = vadd.f32 %v1497, %v2479
  %v2487 = vadd.f32 %v1500, %v2481
  %v2488 = vtanh.pop %v2485
  %v2489 = vtanh.pop %v2486
  %v2490 = vtanh.pop %v2487
  %v2491 = vsub.f32 1.0, %v2430
  %v2492 = vsub.f32 1.0, %v2445
  %v2493 = vsub.f32 1.0, %v2460
  %2497 = vrot.lane.b32.xlu0 %v2488, 96
  %v2498 = vpop.permute.xlu0 %2497
  %2499 = vrot.lane.b32.xlu0 %v2489, 96
  %v2500 = vpop.permute.xlu0 %2499
  %2501 = vrot.lane.b32.xlu0 %v2490, 96
  %v2502 = vpop.permute.xlu0 %2501
  %v2506 = vmul.f32 %v2491, %v2498
  %v2507 = vmul.f32 %v2492, %v2500
  %v2508 = vmul.f32 %v2493, %v2502
  %v2509 = vrot.slane %v2351, 2
  %v2510 = vrot.slane %v2352, 2
  %v2511 = vsel %vm1247, %v2509, %v2510
  %v2512 = vrot.slane %v2353, 2
  %v2513 = vsel %vm1247, %v2510, %v2512
  %v2517 = vmul.f32 %v2430, %v2511
  %v2518 = vmul.f32 %v2445, %v2513
  %v2519 = vmul.f32 %v2460, %v2512
  %v2520 = vadd.f32 %v2506, %v2517
  %v2521 = vadd.f32 %v2507, %v2518
  %v2522 = vadd.f32 %v2508, %v2519
  %v2526 = vrot.slane %v2520, 4
  %v2527 = vrot.slane %v2521, 4
  %v2528 = vsel %vm129, %v2526, %v2527
  %v2529 = vrot.slane %v2522, 4
  %v2530 = vsel %vm129, %v2527, %v2529
  %2531 = vrot.lane.b32.xlu0 %v2528, 96
  %v2532 = vpop.permute.xlu0 %2531
  %2533 = vrot.lane.b32.xlu0 %v2530, 96
  %v2534 = vpop.permute.xlu0 %2533
  %v2535 = vsel %vm1403, %v2532, 0
  %v2537 = vsel %vm1403, %v2534, 0
  %2539 = vmatpush.msra.mxu0 0.0
  %2540 = vmatpush.msra.mxu0 0.0
  %2541 = vmatpush.msra.mxu0 0.0
  %2542 = vmatpush.msra.mxu0 0.0
  %2543 = vmatpush.msra.mxu0 0.0
  %2544 = vmatpush.msra.mxu0 0.0
  %2545 = vmatpush.msra.mxu0 0.0
  %2546 = vmatpush.msra.mxu0 0.0
  %2547 = vmatpush.msra.mxu0 0.0
  %2548 = vmatpush.msra.mxu0 0.0
  %2549 = vmatpush.msra.mxu0 0.0
  %2550 = vmatpush.msra.mxu0 0.0
  %2551 = vmatpush.msra.mxu0 %v1508
  %2552 = vmatpush.msra.mxu0 %v1507
  %2553 = vmatpush.msra.mxu0 %v1506
  %2554 = vmatpush.msra.mxu0 %v1505
  %2555 = vmatmul.f32.gmra.mxu0 %v2535
  %v2556 = vpop.f32.mrf.mxu0
  %v2557 = vadd.f32 %v1511, %v2556
  %2558 = vmatmul.f32.gmra.mxu0 %v2537
  %v2559 = vpop.f32.mrf.mxu0
  %v2560 = vadd.f32 %v1511, %v2559
  %2561 = vdwg.mxu0
  %v2564 = vrot.slane %v2557, 6
  %v2565 = vrot.slane %v2560, 6
  %v2566 = vsel %vm1781, %v2564, %v2565
  %v2569 = vadd.f32 %v1500, %v2564
  %v2570 = vadd.f32 %v1503, %v2566
  %v2571 = vxor.u32 %v2569, 2147483648
  %v2572 = vxor.u32 %v2570, 2147483648
  %v2573 = vmul.f32 %v2571, 1.442695
  %v2574 = vpow.pop %v2573
  %v2575 = vmul.f32 %v2572, 1.442695
  %v2576 = vpow.pop %v2575
  %v2577 = vadd.f32 %v2574, 1.0
  %v2578 = vadd.f32 %v2576, 1.0
  %v2579 = vrcp.pop %v2577
  %v2580 = vmul.f32 %v2577, %v2579
  %v2581 = vsub.f32 1.0, %v2580
  %v2582 = vmul.f32 %v2579, %v2581
  %v2583 = vadd.f32 %v2579, %v2582
  %vm2584 = vweird.f32 %v2577
  %vm2585 = vweird.f32 %v2579
  %vm2586 = vmor %vm2584, %vm2585
  %v2587 = vsel %vm2586, %v2579, %v2583
  %v2588 = vand.u32 2147483647, %v2577
  %vm2589 = vcmp.eq.f32.partialorder %v2588, 8.507059e+37
  %v2590 = vand.u32 %v2577, 2147483648
  %v2591 = vor.u32 1.1754944e-38, %v2590
  %v2592 = vsel %vm2589, %v2591, %v2587
  %v2593 = vmul.f32 1.0, %v2592
  %v2594 = vrcp.pop %v2578
  %v2595 = vmul.f32 %v2578, %v2594
  %v2596 = vsub.f32 1.0, %v2595
  %v2597 = vmul.f32 %v2594, %v2596
  %v2598 = vadd.f32 %v2594, %v2597
  %vm2599 = vweird.f32 %v2578
  %vm2600 = vweird.f32 %v2594
  %vm2601 = vmor %vm2599, %vm2600
  %v2602 = vsel %vm2601, %v2594, %v2598
  %v2603 = vand.u32 2147483647, %v2578
  %vm2604 = vcmp.eq.f32.partialorder %v2603, 8.507059e+37
  %v2605 = vand.u32 %v2578, 2147483648
  %v2606 = vor.u32 1.1754944e-38, %v2605
  %v2607 = vsel %vm2604, %v2606, %v2602
  %v2608 = vmul.f32 1.0, %v2607
  %2609 = vrot.lane.b32.xlu0 %v2564, 64
  %v2610 = vpop.permute.xlu0 %2609
  %2611 = vrot.lane.b32.xlu0 %v2566, 64
  %v2612 = vpop.permute.xlu0 %2611
  %v2615 = vmul.f32 %v2593, %v2610
  %v2616 = vmul.f32 %v2608, %v2612
  %2619 = vrot.lane.b32.xlu0 %v2615, 64
  %v2620 = vpop.permute.xlu0 %2619
  %2621 = vrot.lane.b32.xlu0 %v2616, 64
  %v2622 = vpop.permute.xlu0 %2621
  %v2625 = vadd.f32 %v1500, %v2620
  %v2626 = vadd.f32 %v1503, %v2622
  %v2627 = vtanh.pop %v2625
  %v2628 = vtanh.pop %v2626
  %v2629 = vsub.f32 1.0, %v2593
  %v2630 = vsub.f32 1.0, %v2608
  %2633 = vrot.lane.b32.xlu0 %v2627, 96
  %v2634 = vpop.permute.xlu0 %2633
  %2635 = vrot.lane.b32.xlu0 %v2628, 96
  %v2636 = vpop.permute.xlu0 %2635
  %v2639 = vmul.f32 %v2629, %v2634
  %v2640 = vmul.f32 %v2630, %v2636
  %v2641 = vrot.slane %v2520, 2
  %v2642 = vrot.slane %v2521, 2
  %v2643 = vsel %vm1247, %v2641, %v2642
  %v2644 = vrot.slane %v2522, 2
  %v2645 = vsel %vm1247, %v2642, %v2644
  %v2648 = vmul.f32 %v2593, %v2643
  %v2649 = vmul.f32 %v2608, %v2645
  %v2650 = vadd.f32 %v2639, %v2648
  %v2651 = vadd.f32 %v2640, %v2649
  %2654 = vrot.lane.b32.xlu0 %v2650, 96
  %v2655 = vpop.permute.xlu0 %2654
  %2656 = vrot.lane.b32.xlu0 %v2651, 96
  %v2657 = vpop.permute.xlu0 %2656
  %vm2660 = vcmask 261122
  %2661 = vst.msk [vmem:[%s16 - $0x2] sm:$0xfc] %vm2660, %v2655
  %2662 = vst.msk [vmem:[%s16 + $0x6] sm:$0xff] %vm1403, %v2657
  // Predicated region
  $region66: #{_lambda_.1} parent=0 // pred_check
    _
  $region67: #{_lambda_.1} parent=0 // pred_check_branch
    %2664 = sbr.rel (0) target = $region69
  $region68: #{_lambda_.1} parent=0 // pred_region
    _
  $region69: #{_lambda_.1} parent=0 // pred_fallthru
    _
  // Predicated region
  $region70: #{_lambda_.1} parent=0 // pred_check
    _
  $region71: #{_lambda_.1} parent=0 // pred_check_branch
    %2666 = sbr.rel (0) target = $region73
  $region72: #{_lambda_.1} parent=0 // pred_region
    _
  $region73: #{_lambda_.1} parent=0 // pred_fallthru
    _

</llo_original>
